<compile_context>
chip_gen: v7x
topology: tpu7x:2x2x1
jax: 0.10.0
libtpu: 0.0.40
codegen_flags: <defaults>
</compile_context>

<pallas_src>
import math

import numpy as np
import jax
import jax.numpy as jnp
from jax.experimental import pallas as pl
from jax.experimental.pallas import tpu as pltpu


def _round_up(v, m):
    return -(-v // m) * m


def _pick_fold(d_row):
    """Fold factor so the folded output row is a multiple of the MXU/store lane target."""
    lane_target = 256                       # v6e / v7x: 256-wide MXU N-tiles
    try:
        kind = jax.devices()[0].device_kind.lower()
        if any(t in kind for t in ("v2", "v3", "v4", "v5")):
            lane_target = 128               # 128-wide MXU; 128-lane alignment is enough
    except Exception:
        pass
    return lane_target // math.gcd(d_row, lane_target)


def _pos_enc_kernel(x_ref, b_ref, phase_ref, o_ref):
    # x_ref    : (TM, K0)        f32  folded coordinates
    # b_ref    : (3*K0, D_OUT)   bf16 constant block-diagonal broadcast/scale matrix (x3 limbs)
    # phase_ref: (1, D_OUT)      f32  0 on sin lanes, pi/2 on cos lanes
    # o_ref    : (TM, D_OUT)
    x = x_ref[...].astype(jnp.float32)

    # Exact 3-limb bf16 decomposition of the f32 mantissa (truncation split):
    #   hi  = top 8 significant bits, mid = next 8, lo = remaining <=8  ->  hi+mid+lo == x.
    # Every limb is bf16-exact, and the matrix entries are powers of two (bf16-exact), so a
    # single default-precision bf16 MXU pass reproduces pos = x * 2**k bit-exactly.
    mask = jnp.uint32(0xFFFF0000)
    hi = pltpu.bitcast(pltpu.bitcast(x, jnp.uint32) & mask, jnp.float32)
    r1 = x - hi                                   # exact
    mid = pltpu.bitcast(pltpu.bitcast(r1, jnp.uint32) & mask, jnp.float32)
    lo = r1 - mid                                 # exact, <=8 significant bits
    limbs = jnp.concatenate(
        [hi.astype(jnp.bfloat16), mid.astype(jnp.bfloat16), lo.astype(jnp.bfloat16)],
        axis=1)                                   # (TM, 3*K0) bf16

    pos = jnp.dot(limbs, b_ref[...], preferred_element_type=jnp.float32)

    # cos(x) == sin(x + pi/2): one transcendental over the full width instead of sin+cos+select.
    # The pi/2 phase is added here in f32 (not baked into the bf16 matrix).
    emb = jnp.sin(pos + phase_ref[...])
    o_ref[...] = emb.astype(o_ref.dtype)


def positional_encoding(tensor, channels_per_dim=16, block_rows=16384, out_dtype=None):
    """Pallas implementation of PositionalEncoding.forward.

    tensor: (b, h, w, n_dims) float32 coordinates in [0, 1].
    out_dtype: optional output dtype (e.g. jnp.bfloat16 to halve HBM write traffic).
    """
    if tensor.ndim != 4:
        raise RuntimeError("The input tensor has to be 4d!")
    assert channels_per_dim % 2 == 0
    b, h, w, n_dims = tensor.shape
    n_ch = channels_per_dim // 2
    d_row = n_dims * channels_per_dim               # output features per source row (48)
    out_dtype = tensor.dtype if out_dtype is None else out_dtype

    fold = _pick_fold(d_row)                        # 8 on v5e, 16 on v6e/v7x (for d_row=48)
    k0 = fold * n_dims
    d_out = fold * d_row                            # 384 / 768

    # Buffer from __init__ (deterministic, no params); powers of two -> bf16-exact.
    freqs = (2.0 ** np.linspace(0.0, n_ch - 1, n_ch)).astype(np.float32)

    # Block-diagonal broadcast/scale matrix for the folded layout:
    #   pos[r, s*d_row + c*channels_per_dim + j] = x_fold[r, s*n_dims + c] * freqs[j % n_ch]
    # Stacked vertically 3x so the hi/mid/lo limbs go through a single K = 3*k0 matmul.
    bmat1 = np.zeros((k0, d_out), dtype=np.float32)
    for s in range(fold):
        for c in range(n_dims):
            for j in range(channels_per_dim):
                bmat1[s * n_dims + c, s * d_row + c * channels_per_dim + j] = freqs[j % n_ch]
    bmat = jnp.asarray(np.concatenate([bmat1, bmat1, bmat1], axis=0), dtype=jnp.bfloat16)

    # Per-lane phase: first n_ch lanes of each channels_per_dim group are sin (phase 0),
    # the last n_ch are cos (phase pi/2).  Kept in f32 and added after the matmul.
    lane = np.arange(d_out)
    phase = np.where((lane % channels_per_dim) >= n_ch,
                     np.float32(np.pi / 2), np.float32(0.0)).astype(np.float32)
    phase = jnp.asarray(phase.reshape(1, d_out))

    n = b * h * w
    x = tensor.reshape(n, n_dims)
    pad = (-n) % fold
    if pad:  # rare: only when b*h*w is not a multiple of `fold`
        x = jnp.pad(x, ((0, pad), (0, 0)))
    n_rows = n + pad
    n_f = n_rows // fold
    x_f = x.reshape(n_f, k0)                        # pure row-major reshape

    # Tile: ~block_rows source rows per grid step (multiple of 8 folded rows).  Cap so the
    # grid has >= 2 steps whenever there is enough work, so the "parallel" axis can shard
    # across v7x's two TensorCores.
    tm = max(8, _round_up(min(max(block_rows // fold, 1), n_f), 8))
    if n_f > 8:
        tm = min(tm, _round_up(pl.cdiv(n_f, 2), 8))
    grid = (pl.cdiv(n_f, tm),)
    # NOTE: the last grid step may be a partial block; it computes sin of unspecified padded
    # rows whose results are discarded by the masked store.  This is intentional and safe.

    out_f = pl.pallas_call(
        _pos_enc_kernel,
        out_shape=jax.ShapeDtypeStruct((n_f, d_out), out_dtype),
        grid_spec=pltpu.PrefetchScalarGridSpec(
            num_scalar_prefetch=0,
            grid=grid,
            in_specs=[
                pl.BlockSpec((tm, k0), lambda i: (i, 0)),
                pl.BlockSpec((3 * k0, d_out), lambda i: (0, 0)),   # constant, fetched once
                pl.BlockSpec((1, d_out), lambda i: (0, 0)),        # constant, fetched once
            ],
            out_specs=pl.BlockSpec((tm, d_out), lambda i: (i, 0)),
        ),
        compiler_params=pltpu.CompilerParams(
            dimension_semantics=("parallel",),
            vmem_limit_bytes=48 * 1024 * 1024,      # headroom for big tiles; < v7x's 64 MiB
        ),
    )(x_f, bmat, phase)

    out = out_f.reshape(n_rows, d_row)              # free contiguous reshape
    if pad:
        out = out[:n]
    return out.reshape(b, h, w, d_row)


if __name__ == "__main__":
    key = jax.random.PRNGKey(0)
    b, h, w, n_dims = 2, 16, 16, 3
    channels_per_dim = 16

    x = jax.random.uniform(key, (b, h, w, n_dims), dtype=jnp.float32)

    out = positional_encoding(x, channels_per_dim=channels_per_dim)
    out = jax.block_until_ready(out)

    # Pure-JAX reference (mirrors the PyTorch forward exactly).
    n_ch = channels_per_dim // 2
    freqs = 2.0 ** jnp.linspace(0.0, n_ch - 1, n_ch)
    pos = x[..., None] * freqs[None, None, None, None, :]
    ref = jnp.concatenate([jnp.sin(pos), jnp.cos(pos)], axis=-1)
    ref = ref.reshape(b, h, w, n_dims * channels_per_dim)

    assert out.shape == (b, h, w, n_dims * channels_per_dim), out.shape
    # The sin/cos argument is reproduced bit-exactly (3-limb bf16 split, power-of-two weights);
    # the remaining error budget is the cos = sin(x + pi/2_f32) phase trick (<~4e-6) plus
    # sin range-reduction/implementation differences at |arg| <= 128 between the in-kernel
    # and XLA transcendentals.
    err = float(jnp.max(jnp.abs(out - ref)))
    assert err < 1e-4, err
    print("KERNEL_OK")
</pallas_src>

<mosaic_0001>
module attributes {stable_mosaic.version = 11 : i64} {
  func.func @_pos_enc_kernel(%arg0: i32, %arg1: memref<16x48xf32, #tpu.memory_space<vmem>>, %arg2: memref<144x768xbf16, #tpu.memory_space<vmem>>, %arg3: memref<1x768xf32, #tpu.memory_space<vmem>>, %arg4: memref<16x768xf32, #tpu.memory_space<vmem>>) attributes {dimension_semantics = [#tpu.dimension_semantics<parallel>], iteration_bounds = array<i64: 2>, scalar_prefetch = 0 : i64, scratch_operands = 0 : i64, tpu.core_type = #tpu.core_type<tc>, window_params = [{transform_indices = @transform_0, window_bounds = array<i64: 16, 48>}, {pipeline_mode = #tpu.pipeline_mode<synchronous>, transform_indices = @transform_1, window_bounds = array<i64: 144, 768>}, {pipeline_mode = #tpu.pipeline_mode<synchronous>, transform_indices = @transform_2, window_bounds = array<i64: 1, 768>}, {transform_indices = @transform_3, window_bounds = array<i64: 16, 768>}]} {
    %c0 = arith.constant 0 : index
    %c0_0 = arith.constant 0 : index
    %0 = vector.load %arg1[%c0, %c0_0] : memref<16x48xf32, #tpu.memory_space<vmem>>, vector<16x48xf32>
    %1 = tpu.bitcast %0 : vector<16x48xf32> -> vector<16x48xi32>
    %c-65536_i32 = arith.constant -65536 : i32
    %2 = vector.broadcast %c-65536_i32 : i32 to vector<16x48xi32>
    %3 = arith.andi %1, %2 : vector<16x48xi32>
    %4 = tpu.bitcast %3 : vector<16x48xi32> -> vector<16x48xf32>
    %5 = arith.subf %0, %4 : vector<16x48xf32>
    %6 = tpu.bitcast %5 : vector<16x48xf32> -> vector<16x48xi32>
    %c-65536_i32_1 = arith.constant -65536 : i32
    %7 = vector.broadcast %c-65536_i32_1 : i32 to vector<16x48xi32>
    %8 = arith.andi %6, %7 : vector<16x48xi32>
    %9 = tpu.bitcast %8 : vector<16x48xi32> -> vector<16x48xf32>
    %10 = arith.subf %5, %9 : vector<16x48xf32>
    %11 = arith.truncf %4 : vector<16x48xf32> to vector<16x48xbf16>
    %12 = arith.truncf %9 : vector<16x48xf32> to vector<16x48xbf16>
    %13 = arith.truncf %10 : vector<16x48xf32> to vector<16x48xbf16>
    %14 = tpu.concatenate %11, %12, %13 in 1 : vector<16x48xbf16>, vector<16x48xbf16>, vector<16x48xbf16> -> vector<16x144xbf16>
    %c0_2 = arith.constant 0 : index
    %c0_3 = arith.constant 0 : index
    %15 = vector.load %arg2[%c0_2, %c0_3] : memref<144x768xbf16, #tpu.memory_space<vmem>>, vector<144x768xbf16>
    %cst = arith.constant dense<0.000000e+00> : vector<16x768xf32>
    %16 = tpu.matmul %14, %15, %cst {dimension_numbers = #tpu.dot_dimension_numbers<[1], [0], [0], [1], [0, 0, 1, 1], [], []>} : vector<16x144xbf16>, vector<144x768xbf16>, vector<16x768xf32> -> vector<16x768xf32>
    %c0_4 = arith.constant 0 : index
    %c0_5 = arith.constant 0 : index
    %17 = vector.load %arg3[%c0_4, %c0_5] : memref<1x768xf32, #tpu.memory_space<vmem>>, vector<1x768xf32>
    %18 = vector.broadcast %17 : vector<1x768xf32> to vector<16x768xf32>
    %19 = arith.addf %16, %18 : vector<16x768xf32>
    %20 = math.sin %19 : vector<16x768xf32>
    %c0_6 = arith.constant 0 : index
    %c0_7 = arith.constant 0 : index
    %21 = vector.load %arg4[%c0_6, %c0_7] : memref<16x768xf32, #tpu.memory_space<vmem>>, vector<16x768xf32>
    tpu.vector_store %arg4[%c0_6, %c0_7], %20 {strides = array<i32>} : memref<16x768xf32, #tpu.memory_space<vmem>>, vector<16x768xf32>,
    return
  }
  func.func @transform_0(%arg0: i32) -> (i32, i32) {
    %c0_i32 = arith.constant 0 : i32
    %c0_i32_0 = arith.constant 0 : i32
    return %arg0, %c0_i32 : i32, i32
  }
  func.func @transform_1(%arg0: i32) -> (i32, i32) {
    %c0_i32 = arith.constant 0 : i32
    %c0_i32_0 = arith.constant 0 : i32
    %c0_i32_1 = arith.constant 0 : i32
    return %c0_i32, %c0_i32_0 : i32, i32
  }
  func.func @transform_2(%arg0: i32) -> (i32, i32) {
    %c0_i32 = arith.constant 0 : i32
    %c0_i32_0 = arith.constant 0 : i32
    %c0_i32_1 = arith.constant 0 : i32
    return %c0_i32, %c0_i32_0 : i32, i32
  }
  func.func @transform_3(%arg0: i32) -> (i32, i32) {
    %c0_i32 = arith.constant 0 : i32
    %c0_i32_0 = arith.constant 0 : i32
    return %arg0, %c0_i32 : i32, i32
  }
}

</mosaic_0001>

<llo_original>
// kernel: tpu_custom_call.1
$region0: #{tpu_custom_call.1}
  #allocation0 [shape = 'u32[]', space=smem, size = 0x4, offset = 0x4, fixed_abs, tag = 'smem constant byte address 0x4 - core index']
  #allocation1 [shape = 'u32[144,128]{1,0:T(1,128)}', space=vmem, size = 0x12000, scoped, tag = 'internal scratch']
  %s0 = inlined_call_operand.hbm [shape: f32[32,48], index: 0, kind: input, shape index: {}]
  %s1 = inlined_call_operand.hbm [shape: bf16[144,768], index: 1, kind: input, shape index: {}]
  %s2 = inlined_call_operand.vmem [shape: f32[1,768], index: 2, kind: input, shape index: {}]
  %s3 = inlined_call_operand.hbm [shape: f32[32,768], index: 3, kind: output, shape index: {}]
  %s4 = sld [smem:[#allocation0]]
  $region53: #{tpu_custom_call.1} parent=0
    _
  %s6 = ssub.s32 1, %s4
  %s7 = scalar_select 0, %s6, %s4
  $region1: #{tpu_custom_call.1} parent=0
    #allocation2 [shape = 'u8[16384]{0}', space=vmem, size = 0x4000, scoped, tag = 'input window, operand 0']
    #allocation3 [shape = 's32[2]{0}', space=sflag, size = 0x8, scoped, tag = 'scoped memory for tpu_custom_call.1']
    #allocation4 [shape = 's32[2]{0}', space=sflag, size = 0x8, scoped, tag = 'scoped memory for tpu_custom_call.1']
    #allocation5 [shape = 'u8[221184]{0}', space=vmem, size = 0x36000, scoped, tag = 'input window, operand 1, single buffered']
    #allocation6 [shape = 's32[1]{0}', space=sflag, size = 0x4, scoped, tag = 'scoped memory for tpu_custom_call.1']
    #allocation7 [shape = 'u8[98304]{0}', space=vmem, size = 0x18000, scoped, tag = 'output window, operand 0']
    %8 = vsyncpa [#allocation3], 0
    %s9 = scalar_lea.sflag [#allocation3], 1
    %10 = vsyncpa %s9, 0
    %11 = vsyncpa [#allocation6], 0
    %12 = vsyncpa [#allocation4], 0
    %s13 = scalar_lea.sflag [#allocation4], 1
    %14 = vsyncpa %s13, 0
    loop: start=0, step=1, limit=4
    $region2: #{tpu_custom_call.1} parent=1 // loop_pre_header
      _
    $region3: #{tpu_custom_call.1} parent=1 // loop_header
      %s16 = sphi 0, %s20
      %p17 = scmp.ge.s32.totalorder %s16, 4
      %s26 = sphi 0, %s28
      %s29 = sphi 0, %s26
      %s30 = sphi 0, %s29
      %s46 = sphi 0, %s30
      %s50 = sphi 0, %s50
      %s52 = sphi 0, %s50
      %s53 = sphi 0, %s52
      %s67 = sphi 0, %s53
      %s71 = sphi 0, %s71
      %s73 = sphi 0, %s71
      %s74 = sphi 0, %s73
      %s88 = sphi 0, %s74
      %s94 = sphi 0, %s96
      %s97 = sphi 0, %s94
      %s98 = sphi 0, %s97
      %s114 = sphi 0, %s98
    $region4: #{tpu_custom_call.1} parent=1 // loop_header_branch
      %19 = sbr.rel (%p17) target = $region8
    $region5: #{tpu_custom_call.1} parent=1 // loop_body
      %s21 = ssub.s32 %s16, 1
      %s22 = ssub.s32 %s16, 2
      %s23 = sadd.s32 %s16, 1
      %s24 = ssub.s32 %s16, %s23
      %p25 = scmp.eq.s32.totalorder %s24, 0
      %s27 = sadd.s32 %s26, 1
      %s28 = scalar_select %p25, %s26, %s27
      %p31 = pneg %p25
      %p32 = scmp.eq.s32.totalorder %s16, 1
      %p33 = por %p31, %p32
      %p34 = scmp.ne.s32.totalorder %s26, %s29
      %p35 = scmp.eq.s32.totalorder %s16, 0
      %p36 = por %p34, %p35
      %p37 = scmp.ne.s32.totalorder %s26, %s29
      %p38 = scmp.eq.s32.totalorder %s21, 1
      %p39 = por %p37, %p38
      %p40 = scmp.ne.s32.totalorder %s29, %s30
      %p41 = scmp.eq.s32.totalorder %s21, 0
      %p42 = por %p40, %p41
      %p43 = scmp.ne.s32.totalorder %s29, %s30
      %p44 = scmp.eq.s32.totalorder %s22, 1
      %p45 = por %p43, %p44
      %p47 = scmp.ne.s32.totalorder %s30, %s46
      %p48 = scmp.eq.s32.totalorder %s22, 0
      %p49 = por %p47, %p48
      %s51 = sadd.s32 %s50, 1
      %p54 = scmp.eq.s32.totalorder %s16, 1
      %p55 = scmp.ne.s32.totalorder %s50, %s52
      %p56 = scmp.eq.s32.totalorder %s16, 0
      %p57 = por %p55, %p56
      %p58 = scmp.ne.s32.totalorder %s50, %s52
      %p59 = scmp.eq.s32.totalorder %s21, 1
      %p60 = por %p58, %p59
      %p61 = scmp.ne.s32.totalorder %s52, %s53
      %p62 = scmp.eq.s32.totalorder %s21, 0
      %p63 = por %p61, %p62
      %p64 = scmp.ne.s32.totalorder %s52, %s53
      %p65 = scmp.eq.s32.totalorder %s22, 1
      %p66 = por %p64, %p65
      %p68 = scmp.ne.s32.totalorder %s53, %s67
      %p69 = scmp.eq.s32.totalorder %s22, 0
      %p70 = por %p68, %p69
      %s72 = sadd.s32 %s71, 1
      %p75 = scmp.eq.s32.totalorder %s16, 1
      %p76 = scmp.ne.s32.totalorder %s71, %s73
      %p77 = scmp.eq.s32.totalorder %s16, 0
      %p78 = por %p76, %p77
      %p79 = scmp.ne.s32.totalorder %s71, %s73
      %p80 = scmp.eq.s32.totalorder %s21, 1
      %p81 = por %p79, %p80
      %p82 = scmp.ne.s32.totalorder %s73, %s74
      %p83 = scmp.eq.s32.totalorder %s21, 0
      %p84 = por %p82, %p83
      %p85 = scmp.ne.s32.totalorder %s73, %s74
      %p86 = scmp.eq.s32.totalorder %s22, 1
      %p87 = por %p85, %p86
      %p89 = scmp.ne.s32.totalorder %s74, %s88
      %p90 = scmp.eq.s32.totalorder %s22, 0
      %p91 = por %p89, %p90
      %s92 = ssub.s32 %s16, %s23
      %p93 = scmp.eq.s32.totalorder %s92, 0
      %s95 = sadd.s32 %s94, 1
      %s96 = scalar_select %p93, %s94, %s95
      %p99 = pneg %p93
      %p100 = scmp.eq.s32.totalorder %s16, 1
      %p101 = por %p99, %p100
      %p102 = scmp.ne.s32.totalorder %s94, %s97
      %p103 = scmp.eq.s32.totalorder %s16, 0
      %p104 = por %p102, %p103
      %p105 = scmp.ne.s32.totalorder %s94, %s97
      %p106 = scmp.eq.s32.totalorder %s21, 1
      %p107 = por %p105, %p106
      %p108 = scmp.ne.s32.totalorder %s97, %s98
      %p109 = scmp.eq.s32.totalorder %s21, 0
      %p110 = por %p108, %p109
      %p111 = scmp.ne.s32.totalorder %s97, %s98
      %p112 = scmp.eq.s32.totalorder %s22, 1
      %p113 = por %p111, %p112
      %p115 = scmp.ne.s32.totalorder %s98, %s114
      %p116 = scmp.eq.s32.totalorder %s22, 0
      %p117 = por %p115, %p116
      %p118 = scmp.le.s32.totalorder 1, %s16
      %p119 = scmp.lt.s32.totalorder %s16, 3
      %p120 = pnand %p118, %p119
      %p121 = pneg %p120
      // Predicated region
      $region9: #{tpu_custom_call.1} parent=5 // pred_check
        _
      $region10: #{tpu_custom_call.1} parent=5 // pred_check_branch
        %123 = sbr.rel (%p120) target = $region12
      $region11: #{tpu_custom_call.1} parent=5 // pred_region
        %s124 = ssub.s32 %s16, 1
        // Predicated region
        $region13: #{tpu_custom_call.1} parent=11 // pred_check
          %p125 = pneg %p63
        $region14: #{tpu_custom_call.1} parent=11 // pred_check_branch
          %127 = sbr.rel (%p125) target = $region16
        $region15: #{tpu_custom_call.1} parent=11 // pred_region
          %s129 = ssub.s32 6912, 6912
          %130 = vsyncadd [#allocation6], %s129
          %s131 = sshll.u32 [#allocation5], 4
          %s132 = int_to_ptr.vmem [resolvable:$true] %s131
          %137 = dma.hbm_to_vmem [thread:$0]  %s1, 6912, %s132, [#allocation6], 384, 384, 24
        $region16: #{tpu_custom_call.1} parent=11 // pred_fallthru
          _
        // Predicated region
        $region17: #{tpu_custom_call.1} parent=11 // pred_check
          %p138 = pneg %p84
        $region18: #{tpu_custom_call.1} parent=11 // pred_check_branch
          %140 = sbr.rel (%p138) target = $region20
        $region19: #{tpu_custom_call.1} parent=11 // pred_region
          _
        $region20: #{tpu_custom_call.1} parent=11 // pred_fallthru
          _
      $region12: #{tpu_custom_call.1} parent=5 // pred_fallthru
        _
      %p141 = scmp.lt.s32.totalorder %s16, 2
      // Predicated region
      $region21: #{tpu_custom_call.1} parent=5 // pred_check
        %p142 = pneg %p141
      $region22: #{tpu_custom_call.1} parent=5 // pred_check_branch
        %144 = sbr.rel (%p142) target = $region24
      $region23: #{tpu_custom_call.1} parent=5 // pred_region
        // Predicated region
        $region25: #{tpu_custom_call.1} parent=23 // pred_check
          %p145 = pneg %p36
        $region26: #{tpu_custom_call.1} parent=23 // pred_check_branch
          %147 = sbr.rel (%p145) target = $region28
        $region27: #{tpu_custom_call.1} parent=23 // pred_region
          %s148 = sand.u32 %s26, 1
          %s149 = scalar_lea.sflag [#allocation3], %s148
          %s150 = sand.u32 %s26, 1
          %s151 = smul.addr %s150, 16
          %s152 = scalar_lea.vmem [#allocation2], %s151
          %s153 = smul.u32 2, %s16
          %s155 = ssub.s32 256, 256
          %156 = vsyncadd %s149, %s155
          %s157 = smul.addr %s153, 128
          %s158 = scalar_lea.hbm %s0, %s157
          %s159 = sshll.u32 %s152, 4
          %s160 = int_to_ptr.vmem [resolvable:$true] %s159
          %165 = dma.hbm_to_vmem [thread:$0]  %s158, 256, %s160, %s149, 128, 128, 8
        $region28: #{tpu_custom_call.1} parent=23 // pred_fallthru
          _
      $region24: #{tpu_custom_call.1} parent=5 // pred_fallthru
        _
      %p166 = scmp.le.s32.totalorder 1, %s16
      %p167 = scmp.lt.s32.totalorder %s16, 3
      %p168 = pnand %p166, %p167
      %p169 = pneg %p168
      // Predicated region
      $region29: #{tpu_custom_call.1} parent=5 // pred_check
        _
      $region30: #{tpu_custom_call.1} parent=5 // pred_check_branch
        %171 = sbr.rel (%p168) target = $region32
      $region31: #{tpu_custom_call.1} parent=5 // pred_region
        %s172 = ssub.s32 %s16, 1
        %s173 = sand.u32 %s29, 1
        %s174 = scalar_lea.sflag [#allocation3], %s173
        %s175 = sand.u32 %s29, 1
        %s176 = smul.addr %s175, 16
        %s177 = scalar_lea.vmem [#allocation2], %s176
        // Predicated region
        $region33: #{tpu_custom_call.1} parent=31 // pred_check
          %p178 = pneg %p42
        $region34: #{tpu_custom_call.1} parent=31 // pred_check_branch
          %180 = sbr.rel (%p178) target = $region36
        $region35: #{tpu_custom_call.1} parent=31 // pred_region
          %181 = dma.done %s174, 256
        $region36: #{tpu_custom_call.1} parent=31 // pred_fallthru
          _
        // Predicated region
        $region37: #{tpu_custom_call.1} parent=31 // pred_check
          %p182 = pneg %p63
        $region38: #{tpu_custom_call.1} parent=31 // pred_check_branch
          %184 = sbr.rel (%p182) target = $region40
        $region39: #{tpu_custom_call.1} parent=31 // pred_region
          %185 = dma.done [#allocation6], 6912
        $region40: #{tpu_custom_call.1} parent=31 // pred_fallthru
          _
        %s186 = sand.u32 %s29, 1
        %s187 = scalar_lea.sflag [#allocation3], %s186
        %s188 = sand.u32 %s29, 1
        %s189 = smul.addr %s188, 16
        %s190 = scalar_lea.vmem [#allocation2], %s189
        %p191 = pneg %p42
        %p192 = pneg %p39
        %p193 = pneg %p63
        %p194 = pneg %p60
        %p195 = pneg %p84
        %p196 = pneg %p81
        %p197 = pneg %p110
        %p198 = pneg %p107
        %s199 = sand.u32 %s97, 1
        %s200 = scalar_lea.sflag [#allocation4], %s199
        %s201 = sand.u32 %s97, 1
        %s202 = smul.addr %s201, 96
        %s203 = scalar_lea.vmem [#allocation7], %s202
        %s204 = smul.u32 2, %s21
        %s205 = smul.u32 2, %s21
        %v207 = vld [vmem:[%s177] sm:$0xff]
        %v208 = vld [vmem:[%s177 + $0x8] sm:$0xff]
        %v211 = vand.u32 %v207, 4294901760
        %v212 = vand.u32 %v208, 4294901760
        %v215 = vsub.f32 %v207, %v211
        %v216 = vsub.f32 %v208, %v212
        %v219 = vand.u32 %v215, 4294901760
        %v220 = vand.u32 %v216, 4294901760
        %v223 = vsub.f32 %v215, %v219
        %v224 = vsub.f32 %v216, %v220
        %v225 = vpack.c.bf16 %v212, %v211
        %v226 = vpack.c.bf16 %v220, %v219
        %v227 = vpack.c.bf16 %v224, %v223
        %229 = vrot.lane.b32.xlu0 %v226, 48
        %v230 = vpop.permute.xlu0 %229
        %232 = vrot.lane.b32.xlu0 %v227, 96
        %v233 = vpop.permute.xlu0 %232
        %vm234 = vcmask 392192
        %v237 = vsel %vm234, %v225, %v230
        %vm238 = vcmask 785408
        %v240 = vsel %vm238, %v237, %v233
        %v242 = vld [vmem:[#allocation5] sm:$0xff]
        %v243 = vld [vmem:[#allocation5 + $0x8] sm:$0xff]
        %v244 = vld [vmem:[#allocation5 + $0x10] sm:$0xff]
        %v245 = vld [vmem:[#allocation5 + $0x18] sm:$0xff]
        %v246 = vld [vmem:[#allocation5 + $0x20] sm:$0xff]
        %v247 = vld [vmem:[#allocation5 + $0x28] sm:$0xff]
        %v248 = vld [vmem:[#allocation5 + $0x30] sm:$0xff]
        %v249 = vld [vmem:[#allocation5 + $0x38] sm:$0xff]
        %v250 = vld [vmem:[#allocation5 + $0x40] sm:$0xff]
        %v251 = vld [vmem:[#allocation5 + $0x48] sm:$0xff]
        %v252 = vld [vmem:[#allocation5 + $0x50] sm:$0xff]
        %v253 = vld [vmem:[#allocation5 + $0x58] sm:$0xff]
        %v254 = vld [vmem:[#allocation5 + $0x60] sm:$0xff]
        %v255 = vld [vmem:[#allocation5 + $0x68] sm:$0xff]
        %v256 = vld [vmem:[#allocation5 + $0x70] sm:$0xff]
        %v257 = vld [vmem:[#allocation5 + $0x78] sm:$0xff]
        %v258 = vld [vmem:[#allocation5 + $0x80] sm:$0xff]
        %v259 = vld [vmem:[#allocation5 + $0x88] sm:$0xff]
        %v260 = vld [vmem:[#allocation5 + $0x90] sm:$0xff]
        %v261 = vld [vmem:[#allocation5 + $0x98] sm:$0xff]
        %v262 = vld [vmem:[#allocation5 + $0xa0] sm:$0xff]
        %v263 = vld [vmem:[#allocation5 + $0xa8] sm:$0xff]
        %v264 = vld [vmem:[#allocation5 + $0xb0] sm:$0xff]
        %v265 = vld [vmem:[#allocation5 + $0xb8] sm:$0xff]
        %v266 = vld [vmem:[#allocation5 + $0xc0] sm:$0xff]
        %v267 = vld [vmem:[#allocation5 + $0xc8] sm:$0xff]
        %v268 = vld [vmem:[#allocation5 + $0xd0] sm:$0xff]
        %v269 = vld [vmem:[#allocation5 + $0xd8] sm:$0xff]
        %v270 = vld [vmem:[#allocation5 + $0xe0] sm:$0xff]
        %v271 = vld [vmem:[#allocation5 + $0xe8] sm:$0xff]
        %v272 = vld [vmem:[#allocation5 + $0xf0] sm:$0xff]
        %v273 = vld [vmem:[#allocation5 + $0xf8] sm:$0xff]
        %v274 = vld [vmem:[#allocation5 + $0x100] sm:$0xff]
        %v275 = vld [vmem:[#allocation5 + $0x108] sm:$0xff]
        %v276 = vld [vmem:[#allocation5 + $0x110] sm:$0xff]
        %v277 = vld [vmem:[#allocation5 + $0x118] sm:$0xff]
        %v278 = vld [vmem:[#allocation5 + $0x120] sm:$0xff]
        %v279 = vld [vmem:[#allocation5 + $0x128] sm:$0xff]
        %v280 = vld [vmem:[#allocation5 + $0x130] sm:$0xff]
        %v281 = vld [vmem:[#allocation5 + $0x138] sm:$0xff]
        %v282 = vld [vmem:[#allocation5 + $0x140] sm:$0xff]
        %v283 = vld [vmem:[#allocation5 + $0x148] sm:$0xff]
        %v284 = vld [vmem:[#allocation5 + $0x150] sm:$0xff]
        %v285 = vld [vmem:[#allocation5 + $0x158] sm:$0xff]
        %v286 = vld [vmem:[#allocation5 + $0x160] sm:$0xff]
        %v287 = vld [vmem:[#allocation5 + $0x168] sm:$0xff]
        %v288 = vld [vmem:[#allocation5 + $0x170] sm:$0xff]
        %v289 = vld [vmem:[#allocation5 + $0x178] sm:$0xff]
        %v290 = vld [vmem:[#allocation5 + $0x180] sm:$0xff]
        %v291 = vld [vmem:[#allocation5 + $0x188] sm:$0xff]
        %v292 = vld [vmem:[#allocation5 + $0x190] sm:$0xff]
        %v293 = vld [vmem:[#allocation5 + $0x198] sm:$0xff]
        %v294 = vld [vmem:[#allocation5 + $0x1a0] sm:$0xff]
        %v295 = vld [vmem:[#allocation5 + $0x1a8] sm:$0xff]
        %v296 = vld [vmem:[%s2] sm:$0x3f]
        %v298 = vlaneseq
        %v299 = vshrl.u32 %v298, 7
        %v300 = vsub.s32 0, %v299
        %v301 = vrot.slane %v296, %v300
        %v302 = vlaneseq
        %v303 = vshrl.u32 %v302, 7
        %v304 = vsub.s32 1, %v303
        %v305 = vrot.slane %v296, %v304
        %v306 = vlaneseq
        %v307 = vshrl.u32 %v306, 7
        %v308 = vsub.s32 2, %v307
        %v309 = vrot.slane %v296, %v308
        %v310 = vlaneseq
        %v311 = vshrl.u32 %v310, 7
        %v312 = vsub.s32 3, %v311
        %v313 = vrot.slane %v296, %v312
        %v314 = vlaneseq
        %v315 = vshrl.u32 %v314, 7
        %v316 = vsub.s32 4, %v315
        %v317 = vrot.slane %v296, %v316
        %v318 = vlaneseq
        %v319 = vshrl.u32 %v318, 7
        %v320 = vsub.s32 5, %v319
        %v321 = vrot.slane %v296, %v320
        %v382 = vunpack.c.l.b16 %v242
        %v383 = vunpack.c.h.b16 %v242
        %v384 = vunpack.c.l.b16 %v243
        %v385 = vunpack.c.h.b16 %v243
        %v386 = vunpack.c.l.b16 %v244
        %v387 = vunpack.c.h.b16 %v244
        %v388 = vunpack.c.l.b16 %v245
        %v389 = vunpack.c.h.b16 %v245
        %v390 = vunpack.c.l.b16 %v246
        %v391 = vunpack.c.h.b16 %v246
        %v392 = vunpack.c.l.b16 %v247
        %v393 = vunpack.c.h.b16 %v247
        %v394 = vunpack.c.l.b16 %v248
        %v395 = vunpack.c.h.b16 %v248
        %v396 = vunpack.c.l.b16 %v249
        %v397 = vunpack.c.h.b16 %v249
        %v398 = vunpack.c.l.b16 %v250
        %v399 = vunpack.c.h.b16 %v250
        %v400 = vunpack.c.l.b16 %v251
        %v401 = vunpack.c.h.b16 %v251
        %v402 = vunpack.c.l.b16 %v252
        %v403 = vunpack.c.h.b16 %v252
        %v404 = vunpack.c.l.b16 %v253
        %v405 = vunpack.c.h.b16 %v253
        %v406 = vunpack.c.l.b16 %v254
        %v407 = vunpack.c.h.b16 %v254
        %v408 = vunpack.c.l.b16 %v255
        %v409 = vunpack.c.h.b16 %v255
        %v410 = vunpack.c.l.b16 %v256
        %v411 = vunpack.c.h.b16 %v256
        %v412 = vunpack.c.l.b16 %v257
        %v413 = vunpack.c.h.b16 %v257
        %v414 = vunpack.c.l.b16 %v258
        %v415 = vunpack.c.h.b16 %v258
        %v416 = vunpack.c.l.b16 %v259
        %v417 = vunpack.c.h.b16 %v259
        %v418 = vunpack.c.l.b16 %v260
        %v419 = vunpack.c.h.b16 %v260
        %v420 = vunpack.c.l.b16 %v261
        %v421 = vunpack.c.h.b16 %v261
        %v422 = vunpack.c.l.b16 %v262
        %v423 = vunpack.c.h.b16 %v262
        %v424 = vunpack.c.l.b16 %v263
        %v425 = vunpack.c.h.b16 %v263
        %v426 = vunpack.c.l.b16 %v264
        %v427 = vunpack.c.h.b16 %v264
        %v428 = vunpack.c.l.b16 %v265
        %v429 = vunpack.c.h.b16 %v265
        %v430 = vunpack.c.l.b16 %v266
        %v431 = vunpack.c.h.b16 %v266
        %v432 = vunpack.c.l.b16 %v267
        %v433 = vunpack.c.h.b16 %v267
        %v434 = vunpack.c.l.b16 %v268
        %v435 = vunpack.c.h.b16 %v268
        %v436 = vunpack.c.l.b16 %v269
        %v437 = vunpack.c.h.b16 %v269
        %v438 = vunpack.c.l.b16 %v270
        %v439 = vunpack.c.h.b16 %v270
        %v440 = vunpack.c.l.b16 %v271
        %v441 = vunpack.c.h.b16 %v271
        %v442 = vunpack.c.l.b16 %v272
        %v443 = vunpack.c.h.b16 %v272
        %v444 = vunpack.c.l.b16 %v273
        %v445 = vunpack.c.h.b16 %v273
        %v446 = vunpack.c.l.b16 %v274
        %v447 = vunpack.c.h.b16 %v274
        %v448 = vunpack.c.l.b16 %v275
        %v449 = vunpack.c.h.b16 %v275
        %v450 = vunpack.c.l.b16 %v276
        %v451 = vunpack.c.h.b16 %v276
        %v452 = vunpack.c.l.b16 %v277
        %v453 = vunpack.c.h.b16 %v277
        %v454 = vunpack.c.l.b16 %v278
        %v455 = vunpack.c.h.b16 %v278
        %v456 = vunpack.c.l.b16 %v279
        %v457 = vunpack.c.h.b16 %v279
        %v458 = vunpack.c.l.b16 %v280
        %v459 = vunpack.c.h.b16 %v280
        %v460 = vunpack.c.l.b16 %v281
        %v461 = vunpack.c.h.b16 %v281
        %v462 = vunpack.c.l.b16 %v282
        %v463 = vunpack.c.h.b16 %v282
        %v464 = vunpack.c.l.b16 %v283
        %v465 = vunpack.c.h.b16 %v283
        %v466 = vunpack.c.l.b16 %v284
        %v467 = vunpack.c.h.b16 %v284
        %v468 = vunpack.c.l.b16 %v285
        %v469 = vunpack.c.h.b16 %v285
        %v470 = vunpack.c.l.b16 %v286
        %v471 = vunpack.c.h.b16 %v286
        %v472 = vunpack.c.l.b16 %v287
        %v473 = vunpack.c.h.b16 %v287
        %v474 = vunpack.c.l.b16 %v288
        %v475 = vunpack.c.h.b16 %v288
        %v476 = vunpack.c.l.b16 %v289
        %v477 = vunpack.c.h.b16 %v289
        %v478 = vunpack.c.l.b16 %v290
        %v479 = vunpack.c.h.b16 %v290
        %v480 = vunpack.c.l.b16 %v291
        %v481 = vunpack.c.h.b16 %v291
        %v482 = vunpack.c.l.b16 %v292
        %v483 = vunpack.c.h.b16 %v292
        %v484 = vunpack.c.l.b16 %v293
        %v485 = vunpack.c.h.b16 %v293
        %v486 = vunpack.c.l.b16 %v294
        %v487 = vunpack.c.h.b16 %v294
        %v488 = vunpack.c.l.b16 %v295
        %v489 = vunpack.c.h.b16 %v295
        %v490 = vpack.c.b16 %v388, %v382
        %v491 = vpack.c.b16 %v389, %v383
        %v492 = vpack.c.b16 %v390, %v384
        %v493 = vpack.c.b16 %v391, %v385
        %v494 = vpack.c.b16 %v392, %v386
        %v495 = vpack.c.b16 %v393, %v387
        %v496 = vpack.c.b16 %v400, %v394
        %v497 = vpack.c.b16 %v401, %v395
        %v498 = vpack.c.b16 %v402, %v396
        %v499 = vpack.c.b16 %v403, %v397
        %v500 = vpack.c.b16 %v404, %v398
        %v501 = vpack.c.b16 %v405, %v399
        %v502 = vpack.c.b16 %v412, %v406
        %v503 = vpack.c.b16 %v413, %v407
        %v504 = vpack.c.b16 %v414, %v408
        %v505 = vpack.c.b16 %v415, %v409
        %v506 = vpack.c.b16 %v416, %v410
        %v507 = vpack.c.b16 %v417, %v411
        %v508 = vpack.c.b16 %v424, %v418
        %v509 = vpack.c.b16 %v425, %v419
        %v510 = vpack.c.b16 %v426, %v420
        %v511 = vpack.c.b16 %v427, %v421
        %v512 = vpack.c.b16 %v428, %v422
        %v513 = vpack.c.b16 %v429, %v423
        %v514 = vpack.c.b16 %v436, %v430
        %v515 = vpack.c.b16 %v437, %v431
        %v516 = vpack.c.b16 %v438, %v432
        %v517 = vpack.c.b16 %v439, %v433
        %v518 = vpack.c.b16 %v440, %v434
        %v519 = vpack.c.b16 %v441, %v435
        %v520 = vpack.c.b16 %v448, %v442
        %v521 = vpack.c.b16 %v449, %v443
        %v522 = vpack.c.b16 %v450, %v444
        %v523 = vpack.c.b16 %v451, %v445
        %v524 = vpack.c.b16 %v452, %v446
        %v525 = vpack.c.b16 %v453, %v447
        %v526 = vpack.c.b16 %v460, %v454
        %v527 = vpack.c.b16 %v461, %v455
        %v528 = vpack.c.b16 %v462, %v456
        %v529 = vpack.c.b16 %v463, %v457
        %v530 = vpack.c.b16 %v464, %v458
        %v531 = vpack.c.b16 %v465, %v459
        %v532 = vpack.c.b16 %v472, %v466
        %v533 = vpack.c.b16 %v473, %v467
        %v534 = vpack.c.b16 %v474, %v468
        %v535 = vpack.c.b16 %v475, %v469
        %v536 = vpack.c.b16 %v476, %v470
        %v537 = vpack.c.b16 %v477, %v471
        %v538 = vpack.c.b16 %v484, %v478
        %v539 = vpack.c.b16 %v485, %v479
        %v540 = vpack.c.b16 %v486, %v480
        %v541 = vpack.c.b16 %v487, %v481
        %v542 = vpack.c.b16 %v488, %v482
        %v543 = vpack.c.b16 %v489, %v483
        %vm598 = vcmask 130048
        %v599 = vsel %vm598, %v233, 0
        %601 = vmatprep.subr.bf16.mxu0 %v491
        %602 = vmatpush1.bf16.msra.mxu0 %v490
        %603 = vmatprep.subr.bf16.mxu0 %v497
        %604 = vmatpush1.bf16.msra.mxu0 %v496
        %605 = vmatprep.subr.bf16.mxu0 %v503
        %606 = vmatpush1.bf16.msra.mxu0 %v502
        %607 = vmatprep.subr.bf16.mxu0 %v509
        %608 = vmatpush1.bf16.msra.mxu0 %v508
        %609 = vmatprep.subr.bf16.mxu0 %v515
        %610 = vmatpush1.bf16.msra.mxu0 %v514
        %611 = vmatprep.subr.bf16.mxu0 %v521
        %612 = vmatpush1.bf16.msra.mxu0 %v520
        %613 = vmatprep.subr.bf16.mxu0 %v527
        %614 = vmatpush1.bf16.msra.mxu0 %v526
        %615 = vmatprep.subr.bf16.mxu0 %v533
        %616 = vmatpush1.bf16.msra.mxu0 %v532
        %617 = vmatprep.subr.bf16.mxu0 %v539
        %618 = vmatpush1.bf16.msra.mxu0 %v538
        %619 = vmatprep.subr.bf16.mxu0 0
        %620 = vmatpush1.bf16.msra.mxu0 0
        %621 = vmatprep.subr.bf16.mxu0 0
        %622 = vmatpush1.bf16.msra.mxu0 0
        %623 = vmatprep.subr.bf16.mxu0 0
        %624 = vmatpush1.bf16.msra.mxu0 0
        %625 = vmatprep.subr.bf16.mxu0 0
        %626 = vmatpush1.bf16.msra.mxu0 0
        %627 = vmatprep.subr.bf16.mxu0 0
        %628 = vmatpush1.bf16.msra.mxu0 0
        %629 = vmatprep.subr.bf16.mxu0 0
        %630 = vmatpush1.bf16.msra.mxu0 0
        %631 = vmatprep.subr.bf16.mxu0 0
        %632 = vmatpush1.bf16.msra.mxu0 0
        %633 = vmatprep.mubr.bf16.mxu0 %v599
        %634 = vmatmul.mubr.bf16.gmra.mrb[0].mxu0 %v240
        %v635 = vpop.f32.mrb[0].mxu0
        %v636 = vadd.f32 %v301, %v635
        %v637 = vpop.f32.mrb[0].mxu0
        %v638 = vadd.f32 %v305, %v637
        %v639 = vpop.f32.mrb[0].mxu0
        %v640 = vadd.f32 %v301, %v639
        %v641 = vpop.f32.mrb[0].mxu0
        %v642 = vadd.f32 %v305, %v641
        %643 = vdwg.mxu0
        %644 = vmatprep.subr.bf16.mxu0 %v493
        %645 = vmatpush1.bf16.msra.mxu0 %v492
        %646 = vmatprep.subr.bf16.mxu0 %v499
        %647 = vmatpush1.bf16.msra.mxu0 %v498
        %648 = vmatprep.subr.bf16.mxu0 %v505
        %649 = vmatpush1.bf16.msra.mxu0 %v504
        %650 = vmatprep.subr.bf16.mxu0 %v511
        %651 = vmatpush1.bf16.msra.mxu0 %v510
        %652 = vmatprep.subr.bf16.mxu0 %v517
        %653 = vmatpush1.bf16.msra.mxu0 %v516
        %654 = vmatprep.subr.bf16.mxu0 %v523
        %655 = vmatpush1.bf16.msra.mxu0 %v522
        %656 = vmatprep.subr.bf16.mxu0 %v529
        %657 = vmatpush1.bf16.msra.mxu0 %v528
        %658 = vmatprep.subr.bf16.mxu0 %v535
        %659 = vmatpush1.bf16.msra.mxu0 %v534
        %660 = vmatprep.subr.bf16.mxu0 %v541
        %661 = vmatpush1.bf16.msra.mxu0 %v540
        %662 = vmatprep.subr.bf16.mxu0 0
        %663 = vmatpush1.bf16.msra.mxu0 0
        %664 = vmatprep.subr.bf16.mxu0 0
        %665 = vmatpush1.bf16.msra.mxu0 0
        %666 = vmatprep.subr.bf16.mxu0 0
        %667 = vmatpush1.bf16.msra.mxu0 0
        %668 = vmatprep.subr.bf16.mxu0 0
        %669 = vmatpush1.bf16.msra.mxu0 0
        %670 = vmatprep.subr.bf16.mxu0 0
        %671 = vmatpush1.bf16.msra.mxu0 0
        %672 = vmatprep.subr.bf16.mxu0 0
        %673 = vmatpush1.bf16.msra.mxu0 0
        %674 = vmatprep.subr.bf16.mxu0 0
        %675 = vmatpush1.bf16.msra.mxu0 0
        %676 = vmatprep.mubr.bf16.mxu0 %v599
        %677 = vmatmul.mubr.bf16.gmra.mrb[0].mxu0 %v240
        %v678 = vpop.f32.mrb[0].mxu0
        %v679 = vadd.f32 %v309, %v678
        %v680 = vpop.f32.mrb[0].mxu0
        %v681 = vadd.f32 %v313, %v680
        %v682 = vpop.f32.mrb[0].mxu0
        %v683 = vadd.f32 %v309, %v682
        %v684 = vpop.f32.mrb[0].mxu0
        %v685 = vadd.f32 %v313, %v684
        %686 = vdwg.mxu0
        %687 = vmatprep.subr.bf16.mxu0 %v495
        %688 = vmatpush1.bf16.msra.mxu0 %v494
        %689 = vmatprep.subr.bf16.mxu0 %v501
        %690 = vmatpush1.bf16.msra.mxu0 %v500
        %691 = vmatprep.subr.bf16.mxu0 %v507
        %692 = vmatpush1.bf16.msra.mxu0 %v506
        %693 = vmatprep.subr.bf16.mxu0 %v513
        %694 = vmatpush1.bf16.msra.mxu0 %v512
        %695 = vmatprep.subr.bf16.mxu0 %v519
        %696 = vmatpush1.bf16.msra.mxu0 %v518
        %697 = vmatprep.subr.bf16.mxu0 %v525
        %698 = vmatpush1.bf16.msra.mxu0 %v524
        %699 = vmatprep.subr.bf16.mxu0 %v531
        %700 = vmatpush1.bf16.msra.mxu0 %v530
        %701 = vmatprep.subr.bf16.mxu0 %v537
        %702 = vmatpush1.bf16.msra.mxu0 %v536
        %703 = vmatprep.subr.bf16.mxu0 %v543
        %704 = vmatpush1.bf16.msra.mxu0 %v542
        %705 = vmatprep.subr.bf16.mxu0 0
        %706 = vmatpush1.bf16.msra.mxu0 0
        %707 = vmatprep.subr.bf16.mxu0 0
        %708 = vmatpush1.bf16.msra.mxu0 0
        %709 = vmatprep.subr.bf16.mxu0 0
        %710 = vmatpush1.bf16.msra.mxu0 0
        %711 = vmatprep.subr.bf16.mxu0 0
        %712 = vmatpush1.bf16.msra.mxu0 0
        %713 = vmatprep.subr.bf16.mxu0 0
        %714 = vmatpush1.bf16.msra.mxu0 0
        %715 = vmatprep.subr.bf16.mxu0 0
        %716 = vmatpush1.bf16.msra.mxu0 0
        %717 = vmatprep.subr.bf16.mxu0 0
        %718 = vmatpush1.bf16.msra.mxu0 0
        %719 = vmatprep.mubr.bf16.mxu0 %v599
        %720 = vmatmul.mubr.bf16.gmra.mrb[0].mxu0 %v240
        %v721 = vpop.f32.mrb[0].mxu0
        %v722 = vadd.f32 %v317, %v721
        %v723 = vpop.f32.mrb[0].mxu0
        %v724 = vadd.f32 %v321, %v723
        %v725 = vpop.f32.mrb[0].mxu0
        %v726 = vadd.f32 %v317, %v725
        %v727 = vpop.f32.mrb[0].mxu0
        %v728 = vadd.f32 %v321, %v727
        %729 = vdwg.mxu0
        %v730 = vand.u32 2147483647, %v636
        %vm731 = vcmp.le.f32.partialorder %v730, 0.7853982
        %vm732 = vcmp.lt.s32.totalorder %v636, 0
        %v733 = vand.u32 %v636, 2139095040
        %v734 = vshrl.u32 %v733, 23
        %v735 = vsub.s32 %v734, 127
        %v736 = vand.u32 2147483647, %v636
        %v737 = vand.u32 %v736, 8388607
        %v738 = vor.u32 %v737, 8388608
        %v739 = vsub.s32 0, %v738
        %v740 = vadd.s32 %v735, 1
        %vm741 = vcmp.gt.s32.totalorder %v740, 0
        %v742 = vsel %vm741, %v740, 0
        %v743 = vshrl.u32 %v742, 5
        %v744 = vand.u32 %v742, 31
        %v745 = vsub.s32 32, %v744
        %v746 = vshrl.u32 683565275, %v745
        %v747 = vshll.u32 683565275, %v744
        %v748 = vshrl.u32 2475754826, %v745
        %v749 = vor.u32 %v747, %v748
        %v750 = vshll.u32 2475754826, %v744
        %v751 = vshrl.u32 2131351028, %v745
        %v752 = vor.u32 %v750, %v751
        %v753 = vshll.u32 2131351028, %v744
        %v754 = vshrl.u32 2102212464, %v745
        %v755 = vor.u32 %v753, %v754
        %v756 = vshll.u32 2102212464, %v744
        %v757 = vshrl.u32 920167782, %v745
        %v758 = vor.u32 %v756, %v757
        %v759 = vshll.u32 920167782, %v744
        %v760 = vshrl.u32 1326507024, %v745
        %v761 = vor.u32 %v759, %v760
        %vm762 = vcmp.lt.s32.totalorder %v743, 1
        %vm763 = vcmp.lt.s32.totalorder %v743, 2
        %vm764 = vcmp.lt.s32.totalorder %v743, 3
        %vm765 = vcmp.lt.s32.totalorder %v743, 4
        %v766 = vsel %vm762, %v746, %v749
        %v767 = vsel %vm765, %v755, 2102212464
        %v768 = vsel %vm764, %v752, %v767
        %v769 = vsel %vm763, %v766, %v768
        %v770 = vsel %vm762, %v749, %v752
        %v771 = vsel %vm765, %v758, 920167782
        %v772 = vsel %vm764, %v755, %v771
        %v773 = vsel %vm763, %v770, %v772
        %v774 = vsel %vm762, %v752, %v755
        %v775 = vsel %vm765, %v761, 1326507024
        %v776 = vsel %vm764, %v758, %v775
        %v777 = vsel %vm763, %v774, %v776
        %v778 = vshll.u32 %v738, 8
        %v779 = vmul.u32.u64.compose %v778, %v777
        %v780 = vextract.low.u32 %v779
        %v781 = vextract.high.u32 %v779
        %v782 = vmul.u32.u64.compose %v778, %v773
        %v783 = vextract.low.u32 %v782
        %v784 = vextract.high.u32 %v782
        %v785 = vmul.u32 %v778, %v769
        %v786 = vadd.s32 %v781, %v783
        %vm787 = vc.u32 %v781, %v783
        %v788 = vadd.s32 %v784, 1
        %v789 = vsel %vm787, %v788, %v784
        %v790 = vadd.s32 %v785, %v789
        %v791 = vadd.s32 %v790, 536870912
        %v792 = vshrl.u32 %v791, 30
        %v793 = vshll.u32 %v792, 30
        %v794 = vsub.s32 %v790, %v793
        %vm795 = vcmp.lt.s32.totalorder %v794, 0
        %v796 = vsub.s32 0, %v794
        %v797 = vsel %vm795, %v796, %v794
        %v798 = vclz %v797
        %v799 = vsub.s32 %v798, 2
        %vm800 = vcmp.gt.s32.totalorder 0, %v799
        %v801 = vsel %vm800, 0, %v799
        %v802 = vsub.s32 32, %v801
        %v803 = vshll.u32 %v794, %v801
        %v804 = vshrl.u32 %v786, %v802
        %v805 = vor.u32 %v803, %v804
        %v806 = vsub.s32 4294967266, %v801
        %v807 = vadd.s32 %v806, 127
        %v808 = vshll.u32 %v807, 23
        %v809 = vor.u32 4788187, %v808
        %v810 = vand.u32 2147483647, %v809
        %v812 = vcvt.s32.f32 %v805
        %v813 = vmul.f32 %v812, %v810
        %v814 = vxor.u32 %v813, 2147483648
        %v815 = vsel %vm732, %v814, %v813
        %v816 = vsub.s32 4, %v792
        %v817 = vsel %vm732, %v816, %v792
        %v818 = vsel %vm731, %v636, %v815
        %v819 = vsel %vm731, 0, %v817
        %v820 = vcosq.f32.pop %v818
        %v821 = vsinq.f32.pop %v818
        %vm822 = vweird.f32 %v636
        %v823 = vadd.s32 %v819, 3
        %v824 = vand.u32 %v823, 3
        %vm825 = vcmp.lt.s32.totalorder %v824, 2
        %vm826 = vcmp.eq.s32.totalorder %v824, 0
        %v827 = vxor.u32 %v821, 2147483648
        %v828 = vsel %vm826, %v820, %v827
        %vm829 = vcmp.eq.s32.totalorder %v824, 2
        %v830 = vxor.u32 %v820, 2147483648
        %v831 = vsel %vm829, %v830, %v821
        %v832 = vsel %vm825, %v828, %v831
        %v833 = vsel %vm822, nan, %v832
        %v834 = vand.u32 2147483647, %v638
        %vm835 = vcmp.le.f32.partialorder %v834, 0.7853982
        %vm836 = vcmp.lt.s32.totalorder %v638, 0
        %v837 = vand.u32 %v638, 2139095040
        %v838 = vshrl.u32 %v837, 23
        %v839 = vsub.s32 %v838, 127
        %v840 = vand.u32 2147483647, %v638
        %v841 = vand.u32 %v840, 8388607
        %v842 = vor.u32 %v841, 8388608
        %v843 = vsub.s32 0, %v842
        %v844 = vadd.s32 %v839, 1
        %vm845 = vcmp.gt.s32.totalorder %v844, 0
        %v846 = vsel %vm845, %v844, 0
        %v847 = vshrl.u32 %v846, 5
        %v848 = vand.u32 %v846, 31
        %v849 = vsub.s32 32, %v848
        %v850 = vshrl.u32 683565275, %v849
        %v851 = vshll.u32 683565275, %v848
        %v852 = vshrl.u32 2475754826, %v849
        %v853 = vor.u32 %v851, %v852
        %v854 = vshll.u32 2475754826, %v848
        %v855 = vshrl.u32 2131351028, %v849
        %v856 = vor.u32 %v854, %v855
        %v857 = vshll.u32 2131351028, %v848
        %v858 = vshrl.u32 2102212464, %v849
        %v859 = vor.u32 %v857, %v858
        %v860 = vshll.u32 2102212464, %v848
        %v861 = vshrl.u32 920167782, %v849
        %v862 = vor.u32 %v860, %v861
        %v863 = vshll.u32 920167782, %v848
        %v864 = vshrl.u32 1326507024, %v849
        %v865 = vor.u32 %v863, %v864
        %vm866 = vcmp.lt.s32.totalorder %v847, 1
        %vm867 = vcmp.lt.s32.totalorder %v847, 2
        %vm868 = vcmp.lt.s32.totalorder %v847, 3
        %vm869 = vcmp.lt.s32.totalorder %v847, 4
        %v870 = vsel %vm866, %v850, %v853
        %v871 = vsel %vm869, %v859, 2102212464
        %v872 = vsel %vm868, %v856, %v871
        %v873 = vsel %vm867, %v870, %v872
        %v874 = vsel %vm866, %v853, %v856
        %v875 = vsel %vm869, %v862, 920167782
        %v876 = vsel %vm868, %v859, %v875
        %v877 = vsel %vm867, %v874, %v876
        %v878 = vsel %vm866, %v856, %v859
        %v879 = vsel %vm869, %v865, 1326507024
        %v880 = vsel %vm868, %v862, %v879
        %v881 = vsel %vm867, %v878, %v880
        %v882 = vshll.u32 %v842, 8
        %v883 = vmul.u32.u64.compose %v882, %v881
        %v884 = vextract.low.u32 %v883
        %v885 = vextract.high.u32 %v883
        %v886 = vmul.u32.u64.compose %v882, %v877
        %v887 = vextract.low.u32 %v886
        %v888 = vextract.high.u32 %v886
        %v889 = vmul.u32 %v882, %v873
        %v890 = vadd.s32 %v885, %v887
        %vm891 = vc.u32 %v885, %v887
        %v892 = vadd.s32 %v888, 1
        %v893 = vsel %vm891, %v892, %v888
        %v894 = vadd.s32 %v889, %v893
        %v895 = vadd.s32 %v894, 536870912
        %v896 = vshrl.u32 %v895, 30
        %v897 = vshll.u32 %v896, 30
        %v898 = vsub.s32 %v894, %v897
        %vm899 = vcmp.lt.s32.totalorder %v898, 0
        %v900 = vsub.s32 0, %v898
        %v901 = vsel %vm899, %v900, %v898
        %v902 = vclz %v901
        %v903 = vsub.s32 %v902, 2
        %vm904 = vcmp.gt.s32.totalorder 0, %v903
        %v905 = vsel %vm904, 0, %v903
        %v906 = vsub.s32 32, %v905
        %v907 = vshll.u32 %v898, %v905
        %v908 = vshrl.u32 %v890, %v906
        %v909 = vor.u32 %v907, %v908
        %v910 = vsub.s32 4294967266, %v905
        %v911 = vadd.s32 %v910, 127
        %v912 = vshll.u32 %v911, 23
        %v913 = vor.u32 4788187, %v912
        %v914 = vand.u32 2147483647, %v913
        %v916 = vcvt.s32.f32 %v909
        %v917 = vmul.f32 %v916, %v914
        %v918 = vxor.u32 %v917, 2147483648
        %v919 = vsel %vm836, %v918, %v917
        %v920 = vsub.s32 4, %v896
        %v921 = vsel %vm836, %v920, %v896
        %v922 = vsel %vm835, %v638, %v919
        %v923 = vsel %vm835, 0, %v921
        %v924 = vcosq.f32.pop %v922
        %v925 = vsinq.f32.pop %v922
        %vm926 = vweird.f32 %v638
        %v927 = vadd.s32 %v923, 3
        %v928 = vand.u32 %v927, 3
        %vm929 = vcmp.lt.s32.totalorder %v928, 2
        %vm930 = vcmp.eq.s32.totalorder %v928, 0
        %v931 = vxor.u32 %v925, 2147483648
        %v932 = vsel %vm930, %v924, %v931
        %vm933 = vcmp.eq.s32.totalorder %v928, 2
        %v934 = vxor.u32 %v924, 2147483648
        %v935 = vsel %vm933, %v934, %v925
        %v936 = vsel %vm929, %v932, %v935
        %v937 = vsel %vm926, nan, %v936
        %v938 = vand.u32 2147483647, %v679
        %vm939 = vcmp.le.f32.partialorder %v938, 0.7853982
        %vm940 = vcmp.lt.s32.totalorder %v679, 0
        %v941 = vand.u32 %v679, 2139095040
        %v942 = vshrl.u32 %v941, 23
        %v943 = vsub.s32 %v942, 127
        %v944 = vand.u32 2147483647, %v679
        %v945 = vand.u32 %v944, 8388607
        %v946 = vor.u32 %v945, 8388608
        %v947 = vsub.s32 0, %v946
        %v948 = vadd.s32 %v943, 1
        %vm949 = vcmp.gt.s32.totalorder %v948, 0
        %v950 = vsel %vm949, %v948, 0
        %v951 = vshrl.u32 %v950, 5
        %v952 = vand.u32 %v950, 31
        %v953 = vsub.s32 32, %v952
        %v954 = vshrl.u32 683565275, %v953
        %v955 = vshll.u32 683565275, %v952
        %v956 = vshrl.u32 2475754826, %v953
        %v957 = vor.u32 %v955, %v956
        %v958 = vshll.u32 2475754826, %v952
        %v959 = vshrl.u32 2131351028, %v953
        %v960 = vor.u32 %v958, %v959
        %v961 = vshll.u32 2131351028, %v952
        %v962 = vshrl.u32 2102212464, %v953
        %v963 = vor.u32 %v961, %v962
        %v964 = vshll.u32 2102212464, %v952
        %v965 = vshrl.u32 920167782, %v953
        %v966 = vor.u32 %v964, %v965
        %v967 = vshll.u32 920167782, %v952
        %v968 = vshrl.u32 1326507024, %v953
        %v969 = vor.u32 %v967, %v968
        %vm970 = vcmp.lt.s32.totalorder %v951, 1
        %vm971 = vcmp.lt.s32.totalorder %v951, 2
        %vm972 = vcmp.lt.s32.totalorder %v951, 3
        %vm973 = vcmp.lt.s32.totalorder %v951, 4
        %v974 = vsel %vm970, %v954, %v957
        %v975 = vsel %vm973, %v963, 2102212464
        %v976 = vsel %vm972, %v960, %v975
        %v977 = vsel %vm971, %v974, %v976
        %v978 = vsel %vm970, %v957, %v960
        %v979 = vsel %vm973, %v966, 920167782
        %v980 = vsel %vm972, %v963, %v979
        %v981 = vsel %vm971, %v978, %v980
        %v982 = vsel %vm970, %v960, %v963
        %v983 = vsel %vm973, %v969, 1326507024
        %v984 = vsel %vm972, %v966, %v983
        %v985 = vsel %vm971, %v982, %v984
        %v986 = vshll.u32 %v946, 8
        %v987 = vmul.u32.u64.compose %v986, %v985
        %v988 = vextract.low.u32 %v987
        %v989 = vextract.high.u32 %v987
        %v990 = vmul.u32.u64.compose %v986, %v981
        %v991 = vextract.low.u32 %v990
        %v992 = vextract.high.u32 %v990
        %v993 = vmul.u32 %v986, %v977
        %v994 = vadd.s32 %v989, %v991
        %vm995 = vc.u32 %v989, %v991
        %v996 = vadd.s32 %v992, 1
        %v997 = vsel %vm995, %v996, %v992
        %v998 = vadd.s32 %v993, %v997
        %v999 = vadd.s32 %v998, 536870912
        %v1000 = vshrl.u32 %v999, 30
        %v1001 = vshll.u32 %v1000, 30
        %v1002 = vsub.s32 %v998, %v1001
        %vm1003 = vcmp.lt.s32.totalorder %v1002, 0
        %v1004 = vsub.s32 0, %v1002
        %v1005 = vsel %vm1003, %v1004, %v1002
        %v1006 = vclz %v1005
        %v1007 = vsub.s32 %v1006, 2
        %vm1008 = vcmp.gt.s32.totalorder 0, %v1007
        %v1009 = vsel %vm1008, 0, %v1007
        %v1010 = vsub.s32 32, %v1009
        %v1011 = vshll.u32 %v1002, %v1009
        %v1012 = vshrl.u32 %v994, %v1010
        %v1013 = vor.u32 %v1011, %v1012
        %v1014 = vsub.s32 4294967266, %v1009
        %v1015 = vadd.s32 %v1014, 127
        %v1016 = vshll.u32 %v1015, 23
        %v1017 = vor.u32 4788187, %v1016
        %v1018 = vand.u32 2147483647, %v1017
        %v1020 = vcvt.s32.f32 %v1013
        %v1021 = vmul.f32 %v1020, %v1018
        %v1022 = vxor.u32 %v1021, 2147483648
        %v1023 = vsel %vm940, %v1022, %v1021
        %v1024 = vsub.s32 4, %v1000
        %v1025 = vsel %vm940, %v1024, %v1000
        %v1026 = vsel %vm939, %v679, %v1023
        %v1027 = vsel %vm939, 0, %v1025
        %v1028 = vcosq.f32.pop %v1026
        %v1029 = vsinq.f32.pop %v1026
        %vm1030 = vweird.f32 %v679
        %v1031 = vadd.s32 %v1027, 3
        %v1032 = vand.u32 %v1031, 3
        %vm1033 = vcmp.lt.s32.totalorder %v1032, 2
        %vm1034 = vcmp.eq.s32.totalorder %v1032, 0
        %v1035 = vxor.u32 %v1029, 2147483648
        %v1036 = vsel %vm1034, %v1028, %v1035
        %vm1037 = vcmp.eq.s32.totalorder %v1032, 2
        %v1038 = vxor.u32 %v1028, 2147483648
        %v1039 = vsel %vm1037, %v1038, %v1029
        %v1040 = vsel %vm1033, %v1036, %v1039
        %v1041 = vsel %vm1030, nan, %v1040
        %v1042 = vand.u32 2147483647, %v681
        %vm1043 = vcmp.le.f32.partialorder %v1042, 0.7853982
        %vm1044 = vcmp.lt.s32.totalorder %v681, 0
        %v1045 = vand.u32 %v681, 2139095040
        %v1046 = vshrl.u32 %v1045, 23
        %v1047 = vsub.s32 %v1046, 127
        %v1048 = vand.u32 2147483647, %v681
        %v1049 = vand.u32 %v1048, 8388607
        %v1050 = vor.u32 %v1049, 8388608
        %v1051 = vsub.s32 0, %v1050
        %v1052 = vadd.s32 %v1047, 1
        %vm1053 = vcmp.gt.s32.totalorder %v1052, 0
        %v1054 = vsel %vm1053, %v1052, 0
        %v1055 = vshrl.u32 %v1054, 5
        %v1056 = vand.u32 %v1054, 31
        %v1057 = vsub.s32 32, %v1056
        %v1058 = vshrl.u32 683565275, %v1057
        %v1059 = vshll.u32 683565275, %v1056
        %v1060 = vshrl.u32 2475754826, %v1057
        %v1061 = vor.u32 %v1059, %v1060
        %v1062 = vshll.u32 2475754826, %v1056
        %v1063 = vshrl.u32 2131351028, %v1057
        %v1064 = vor.u32 %v1062, %v1063
        %v1065 = vshll.u32 2131351028, %v1056
        %v1066 = vshrl.u32 2102212464, %v1057
        %v1067 = vor.u32 %v1065, %v1066
        %v1068 = vshll.u32 2102212464, %v1056
        %v1069 = vshrl.u32 920167782, %v1057
        %v1070 = vor.u32 %v1068, %v1069
        %v1071 = vshll.u32 920167782, %v1056
        %v1072 = vshrl.u32 1326507024, %v1057
        %v1073 = vor.u32 %v1071, %v1072
        %vm1074 = vcmp.lt.s32.totalorder %v1055, 1
        %vm1075 = vcmp.lt.s32.totalorder %v1055, 2
        %vm1076 = vcmp.lt.s32.totalorder %v1055, 3
        %vm1077 = vcmp.lt.s32.totalorder %v1055, 4
        %v1078 = vsel %vm1074, %v1058, %v1061
        %v1079 = vsel %vm1077, %v1067, 2102212464
        %v1080 = vsel %vm1076, %v1064, %v1079
        %v1081 = vsel %vm1075, %v1078, %v1080
        %v1082 = vsel %vm1074, %v1061, %v1064
        %v1083 = vsel %vm1077, %v1070, 920167782
        %v1084 = vsel %vm1076, %v1067, %v1083
        %v1085 = vsel %vm1075, %v1082, %v1084
        %v1086 = vsel %vm1074, %v1064, %v1067
        %v1087 = vsel %vm1077, %v1073, 1326507024
        %v1088 = vsel %vm1076, %v1070, %v1087
        %v1089 = vsel %vm1075, %v1086, %v1088
        %v1090 = vshll.u32 %v1050, 8
        %v1091 = vmul.u32.u64.compose %v1090, %v1089
        %v1092 = vextract.low.u32 %v1091
        %v1093 = vextract.high.u32 %v1091
        %v1094 = vmul.u32.u64.compose %v1090, %v1085
        %v1095 = vextract.low.u32 %v1094
        %v1096 = vextract.high.u32 %v1094
        %v1097 = vmul.u32 %v1090, %v1081
        %v1098 = vadd.s32 %v1093, %v1095
        %vm1099 = vc.u32 %v1093, %v1095
        %v1100 = vadd.s32 %v1096, 1
        %v1101 = vsel %vm1099, %v1100, %v1096
        %v1102 = vadd.s32 %v1097, %v1101
        %v1103 = vadd.s32 %v1102, 536870912
        %v1104 = vshrl.u32 %v1103, 30
        %v1105 = vshll.u32 %v1104, 30
        %v1106 = vsub.s32 %v1102, %v1105
        %vm1107 = vcmp.lt.s32.totalorder %v1106, 0
        %v1108 = vsub.s32 0, %v1106
        %v1109 = vsel %vm1107, %v1108, %v1106
        %v1110 = vclz %v1109
        %v1111 = vsub.s32 %v1110, 2
        %vm1112 = vcmp.gt.s32.totalorder 0, %v1111
        %v1113 = vsel %vm1112, 0, %v1111
        %v1114 = vsub.s32 32, %v1113
        %v1115 = vshll.u32 %v1106, %v1113
        %v1116 = vshrl.u32 %v1098, %v1114
        %v1117 = vor.u32 %v1115, %v1116
        %v1118 = vsub.s32 4294967266, %v1113
        %v1119 = vadd.s32 %v1118, 127
        %v1120 = vshll.u32 %v1119, 23
        %v1121 = vor.u32 4788187, %v1120
        %v1122 = vand.u32 2147483647, %v1121
        %v1124 = vcvt.s32.f32 %v1117
        %v1125 = vmul.f32 %v1124, %v1122
        %v1126 = vxor.u32 %v1125, 2147483648
        %v1127 = vsel %vm1044, %v1126, %v1125
        %v1128 = vsub.s32 4, %v1104
        %v1129 = vsel %vm1044, %v1128, %v1104
        %v1130 = vsel %vm1043, %v681, %v1127
        %v1131 = vsel %vm1043, 0, %v1129
        %v1132 = vcosq.f32.pop %v1130
        %v1133 = vsinq.f32.pop %v1130
        %vm1134 = vweird.f32 %v681
        %v1135 = vadd.s32 %v1131, 3
        %v1136 = vand.u32 %v1135, 3
        %vm1137 = vcmp.lt.s32.totalorder %v1136, 2
        %vm1138 = vcmp.eq.s32.totalorder %v1136, 0
        %v1139 = vxor.u32 %v1133, 2147483648
        %v1140 = vsel %vm1138, %v1132, %v1139
        %vm1141 = vcmp.eq.s32.totalorder %v1136, 2
        %v1142 = vxor.u32 %v1132, 2147483648
        %v1143 = vsel %vm1141, %v1142, %v1133
        %v1144 = vsel %vm1137, %v1140, %v1143
        %v1145 = vsel %vm1134, nan, %v1144
        %v1146 = vand.u32 2147483647, %v722
        %vm1147 = vcmp.le.f32.partialorder %v1146, 0.7853982
        %vm1148 = vcmp.lt.s32.totalorder %v722, 0
        %v1149 = vand.u32 %v722, 2139095040
        %v1150 = vshrl.u32 %v1149, 23
        %v1151 = vsub.s32 %v1150, 127
        %v1152 = vand.u32 2147483647, %v722
        %v1153 = vand.u32 %v1152, 8388607
        %v1154 = vor.u32 %v1153, 8388608
        %v1155 = vsub.s32 0, %v1154
        %v1156 = vadd.s32 %v1151, 1
        %vm1157 = vcmp.gt.s32.totalorder %v1156, 0
        %v1158 = vsel %vm1157, %v1156, 0
        %v1159 = vshrl.u32 %v1158, 5
        %v1160 = vand.u32 %v1158, 31
        %v1161 = vsub.s32 32, %v1160
        %v1162 = vshrl.u32 683565275, %v1161
        %v1163 = vshll.u32 683565275, %v1160
        %v1164 = vshrl.u32 2475754826, %v1161
        %v1165 = vor.u32 %v1163, %v1164
        %v1166 = vshll.u32 2475754826, %v1160
        %v1167 = vshrl.u32 2131351028, %v1161
        %v1168 = vor.u32 %v1166, %v1167
        %v1169 = vshll.u32 2131351028, %v1160
        %v1170 = vshrl.u32 2102212464, %v1161
        %v1171 = vor.u32 %v1169, %v1170
        %v1172 = vshll.u32 2102212464, %v1160
        %v1173 = vshrl.u32 920167782, %v1161
        %v1174 = vor.u32 %v1172, %v1173
        %v1175 = vshll.u32 920167782, %v1160
        %v1176 = vshrl.u32 1326507024, %v1161
        %v1177 = vor.u32 %v1175, %v1176
        %vm1178 = vcmp.lt.s32.totalorder %v1159, 1
        %vm1179 = vcmp.lt.s32.totalorder %v1159, 2
        %vm1180 = vcmp.lt.s32.totalorder %v1159, 3
        %vm1181 = vcmp.lt.s32.totalorder %v1159, 4
        %v1182 = vsel %vm1178, %v1162, %v1165
        %v1183 = vsel %vm1181, %v1171, 2102212464
        %v1184 = vsel %vm1180, %v1168, %v1183
        %v1185 = vsel %vm1179, %v1182, %v1184
        %v1186 = vsel %vm1178, %v1165, %v1168
        %v1187 = vsel %vm1181, %v1174, 920167782
        %v1188 = vsel %vm1180, %v1171, %v1187
        %v1189 = vsel %vm1179, %v1186, %v1188
        %v1190 = vsel %vm1178, %v1168, %v1171
        %v1191 = vsel %vm1181, %v1177, 1326507024
        %v1192 = vsel %vm1180, %v1174, %v1191
        %v1193 = vsel %vm1179, %v1190, %v1192
        %v1194 = vshll.u32 %v1154, 8
        %v1195 = vmul.u32.u64.compose %v1194, %v1193
        %v1196 = vextract.low.u32 %v1195
        %v1197 = vextract.high.u32 %v1195
        %v1198 = vmul.u32.u64.compose %v1194, %v1189
        %v1199 = vextract.low.u32 %v1198
        %v1200 = vextract.high.u32 %v1198
        %v1201 = vmul.u32 %v1194, %v1185
        %v1202 = vadd.s32 %v1197, %v1199
        %vm1203 = vc.u32 %v1197, %v1199
        %v1204 = vadd.s32 %v1200, 1
        %v1205 = vsel %vm1203, %v1204, %v1200
        %v1206 = vadd.s32 %v1201, %v1205
        %v1207 = vadd.s32 %v1206, 536870912
        %v1208 = vshrl.u32 %v1207, 30
        %v1209 = vshll.u32 %v1208, 30
        %v1210 = vsub.s32 %v1206, %v1209
        %vm1211 = vcmp.lt.s32.totalorder %v1210, 0
        %v1212 = vsub.s32 0, %v1210
        %v1213 = vsel %vm1211, %v1212, %v1210
        %v1214 = vclz %v1213
        %v1215 = vsub.s32 %v1214, 2
        %vm1216 = vcmp.gt.s32.totalorder 0, %v1215
        %v1217 = vsel %vm1216, 0, %v1215
        %v1218 = vsub.s32 32, %v1217
        %v1219 = vshll.u32 %v1210, %v1217
        %v1220 = vshrl.u32 %v1202, %v1218
        %v1221 = vor.u32 %v1219, %v1220
        %v1222 = vsub.s32 4294967266, %v1217
        %v1223 = vadd.s32 %v1222, 127
        %v1224 = vshll.u32 %v1223, 23
        %v1225 = vor.u32 4788187, %v1224
        %v1226 = vand.u32 2147483647, %v1225
        %v1228 = vcvt.s32.f32 %v1221
        %v1229 = vmul.f32 %v1228, %v1226
        %v1230 = vxor.u32 %v1229, 2147483648
        %v1231 = vsel %vm1148, %v1230, %v1229
        %v1232 = vsub.s32 4, %v1208
        %v1233 = vsel %vm1148, %v1232, %v1208
        %v1234 = vsel %vm1147, %v722, %v1231
        %v1235 = vsel %vm1147, 0, %v1233
        %v1236 = vcosq.f32.pop %v1234
        %v1237 = vsinq.f32.pop %v1234
        %vm1238 = vweird.f32 %v722
        %v1239 = vadd.s32 %v1235, 3
        %v1240 = vand.u32 %v1239, 3
        %vm1241 = vcmp.lt.s32.totalorder %v1240, 2
        %vm1242 = vcmp.eq.s32.totalorder %v1240, 0
        %v1243 = vxor.u32 %v1237, 2147483648
        %v1244 = vsel %vm1242, %v1236, %v1243
        %vm1245 = vcmp.eq.s32.totalorder %v1240, 2
        %v1246 = vxor.u32 %v1236, 2147483648
        %v1247 = vsel %vm1245, %v1246, %v1237
        %v1248 = vsel %vm1241, %v1244, %v1247
        %v1249 = vsel %vm1238, nan, %v1248
        %v1250 = vand.u32 2147483647, %v724
        %vm1251 = vcmp.le.f32.partialorder %v1250, 0.7853982
        %vm1252 = vcmp.lt.s32.totalorder %v724, 0
        %v1253 = vand.u32 %v724, 2139095040
        %v1254 = vshrl.u32 %v1253, 23
        %v1255 = vsub.s32 %v1254, 127
        %v1256 = vand.u32 2147483647, %v724
        %v1257 = vand.u32 %v1256, 8388607
        %v1258 = vor.u32 %v1257, 8388608
        %v1259 = vsub.s32 0, %v1258
        %v1260 = vadd.s32 %v1255, 1
        %vm1261 = vcmp.gt.s32.totalorder %v1260, 0
        %v1262 = vsel %vm1261, %v1260, 0
        %v1263 = vshrl.u32 %v1262, 5
        %v1264 = vand.u32 %v1262, 31
        %v1265 = vsub.s32 32, %v1264
        %v1266 = vshrl.u32 683565275, %v1265
        %v1267 = vshll.u32 683565275, %v1264
        %v1268 = vshrl.u32 2475754826, %v1265
        %v1269 = vor.u32 %v1267, %v1268
        %v1270 = vshll.u32 2475754826, %v1264
        %v1271 = vshrl.u32 2131351028, %v1265
        %v1272 = vor.u32 %v1270, %v1271
        %v1273 = vshll.u32 2131351028, %v1264
        %v1274 = vshrl.u32 2102212464, %v1265
        %v1275 = vor.u32 %v1273, %v1274
        %v1276 = vshll.u32 2102212464, %v1264
        %v1277 = vshrl.u32 920167782, %v1265
        %v1278 = vor.u32 %v1276, %v1277
        %v1279 = vshll.u32 920167782, %v1264
        %v1280 = vshrl.u32 1326507024, %v1265
        %v1281 = vor.u32 %v1279, %v1280
        %vm1282 = vcmp.lt.s32.totalorder %v1263, 1
        %vm1283 = vcmp.lt.s32.totalorder %v1263, 2
        %vm1284 = vcmp.lt.s32.totalorder %v1263, 3
        %vm1285 = vcmp.lt.s32.totalorder %v1263, 4
        %v1286 = vsel %vm1282, %v1266, %v1269
        %v1287 = vsel %vm1285, %v1275, 2102212464
        %v1288 = vsel %vm1284, %v1272, %v1287
        %v1289 = vsel %vm1283, %v1286, %v1288
        %v1290 = vsel %vm1282, %v1269, %v1272
        %v1291 = vsel %vm1285, %v1278, 920167782
        %v1292 = vsel %vm1284, %v1275, %v1291
        %v1293 = vsel %vm1283, %v1290, %v1292
        %v1294 = vsel %vm1282, %v1272, %v1275
        %v1295 = vsel %vm1285, %v1281, 1326507024
        %v1296 = vsel %vm1284, %v1278, %v1295
        %v1297 = vsel %vm1283, %v1294, %v1296
        %v1298 = vshll.u32 %v1258, 8
        %v1299 = vmul.u32.u64.compose %v1298, %v1297
        %v1300 = vextract.low.u32 %v1299
        %v1301 = vextract.high.u32 %v1299
        %v1302 = vmul.u32.u64.compose %v1298, %v1293
        %v1303 = vextract.low.u32 %v1302
        %v1304 = vextract.high.u32 %v1302
        %v1305 = vmul.u32 %v1298, %v1289
        %v1306 = vadd.s32 %v1301, %v1303
        %vm1307 = vc.u32 %v1301, %v1303
        %v1308 = vadd.s32 %v1304, 1
        %v1309 = vsel %vm1307, %v1308, %v1304
        %v1310 = vadd.s32 %v1305, %v1309
        %v1311 = vadd.s32 %v1310, 536870912
        %v1312 = vshrl.u32 %v1311, 30
        %v1313 = vshll.u32 %v1312, 30
        %v1314 = vsub.s32 %v1310, %v1313
        %vm1315 = vcmp.lt.s32.totalorder %v1314, 0
        %v1316 = vsub.s32 0, %v1314
        %v1317 = vsel %vm1315, %v1316, %v1314
        %v1318 = vclz %v1317
        %v1319 = vsub.s32 %v1318, 2
        %vm1320 = vcmp.gt.s32.totalorder 0, %v1319
        %v1321 = vsel %vm1320, 0, %v1319
        %v1322 = vsub.s32 32, %v1321
        %v1323 = vshll.u32 %v1314, %v1321
        %v1324 = vshrl.u32 %v1306, %v1322
        %v1325 = vor.u32 %v1323, %v1324
        %v1326 = vsub.s32 4294967266, %v1321
        %v1327 = vadd.s32 %v1326, 127
        %v1328 = vshll.u32 %v1327, 23
        %v1329 = vor.u32 4788187, %v1328
        %v1330 = vand.u32 2147483647, %v1329
        %v1332 = vcvt.s32.f32 %v1325
        %v1333 = vmul.f32 %v1332, %v1330
        %v1334 = vxor.u32 %v1333, 2147483648
        %v1335 = vsel %vm1252, %v1334, %v1333
        %v1336 = vsub.s32 4, %v1312
        %v1337 = vsel %vm1252, %v1336, %v1312
        %v1338 = vsel %vm1251, %v724, %v1335
        %v1339 = vsel %vm1251, 0, %v1337
        %v1340 = vcosq.f32.pop %v1338
        %v1341 = vsinq.f32.pop %v1338
        %vm1342 = vweird.f32 %v724
        %v1343 = vadd.s32 %v1339, 3
        %v1344 = vand.u32 %v1343, 3
        %vm1345 = vcmp.lt.s32.totalorder %v1344, 2
        %vm1346 = vcmp.eq.s32.totalorder %v1344, 0
        %v1347 = vxor.u32 %v1341, 2147483648
        %v1348 = vsel %vm1346, %v1340, %v1347
        %vm1349 = vcmp.eq.s32.totalorder %v1344, 2
        %v1350 = vxor.u32 %v1340, 2147483648
        %v1351 = vsel %vm1349, %v1350, %v1341
        %v1352 = vsel %vm1345, %v1348, %v1351
        %v1353 = vsel %vm1342, nan, %v1352
        %v1354 = vand.u32 2147483647, %v640
        %vm1355 = vcmp.le.f32.partialorder %v1354, 0.7853982
        %vm1356 = vcmp.lt.s32.totalorder %v640, 0
        %v1357 = vand.u32 %v640, 2139095040
        %v1358 = vshrl.u32 %v1357, 23
        %v1359 = vsub.s32 %v1358, 127
        %v1360 = vand.u32 2147483647, %v640
        %v1361 = vand.u32 %v1360, 8388607
        %v1362 = vor.u32 %v1361, 8388608
        %v1363 = vsub.s32 0, %v1362
        %v1364 = vadd.s32 %v1359, 1
        %vm1365 = vcmp.gt.s32.totalorder %v1364, 0
        %v1366 = vsel %vm1365, %v1364, 0
        %v1367 = vshrl.u32 %v1366, 5
        %v1368 = vand.u32 %v1366, 31
        %v1369 = vsub.s32 32, %v1368
        %v1370 = vshrl.u32 683565275, %v1369
        %v1371 = vshll.u32 683565275, %v1368
        %v1372 = vshrl.u32 2475754826, %v1369
        %v1373 = vor.u32 %v1371, %v1372
        %v1374 = vshll.u32 2475754826, %v1368
        %v1375 = vshrl.u32 2131351028, %v1369
        %v1376 = vor.u32 %v1374, %v1375
        %v1377 = vshll.u32 2131351028, %v1368
        %v1378 = vshrl.u32 2102212464, %v1369
        %v1379 = vor.u32 %v1377, %v1378
        %v1380 = vshll.u32 2102212464, %v1368
        %v1381 = vshrl.u32 920167782, %v1369
        %v1382 = vor.u32 %v1380, %v1381
        %v1383 = vshll.u32 920167782, %v1368
        %v1384 = vshrl.u32 1326507024, %v1369
        %v1385 = vor.u32 %v1383, %v1384
        %vm1386 = vcmp.lt.s32.totalorder %v1367, 1
        %vm1387 = vcmp.lt.s32.totalorder %v1367, 2
        %vm1388 = vcmp.lt.s32.totalorder %v1367, 3
        %vm1389 = vcmp.lt.s32.totalorder %v1367, 4
        %v1390 = vsel %vm1386, %v1370, %v1373
        %v1391 = vsel %vm1389, %v1379, 2102212464
        %v1392 = vsel %vm1388, %v1376, %v1391
        %v1393 = vsel %vm1387, %v1390, %v1392
        %v1394 = vsel %vm1386, %v1373, %v1376
        %v1395 = vsel %vm1389, %v1382, 920167782
        %v1396 = vsel %vm1388, %v1379, %v1395
        %v1397 = vsel %vm1387, %v1394, %v1396
        %v1398 = vsel %vm1386, %v1376, %v1379
        %v1399 = vsel %vm1389, %v1385, 1326507024
        %v1400 = vsel %vm1388, %v1382, %v1399
        %v1401 = vsel %vm1387, %v1398, %v1400
        %v1402 = vshll.u32 %v1362, 8
        %v1403 = vmul.u32.u64.compose %v1402, %v1401
        %v1404 = vextract.low.u32 %v1403
        %v1405 = vextract.high.u32 %v1403
        %v1406 = vmul.u32.u64.compose %v1402, %v1397
        %v1407 = vextract.low.u32 %v1406
        %v1408 = vextract.high.u32 %v1406
        %v1409 = vmul.u32 %v1402, %v1393
        %v1410 = vadd.s32 %v1405, %v1407
        %vm1411 = vc.u32 %v1405, %v1407
        %v1412 = vadd.s32 %v1408, 1
        %v1413 = vsel %vm1411, %v1412, %v1408
        %v1414 = vadd.s32 %v1409, %v1413
        %v1415 = vadd.s32 %v1414, 536870912
        %v1416 = vshrl.u32 %v1415, 30
        %v1417 = vshll.u32 %v1416, 30
        %v1418 = vsub.s32 %v1414, %v1417
        %vm1419 = vcmp.lt.s32.totalorder %v1418, 0
        %v1420 = vsub.s32 0, %v1418
        %v1421 = vsel %vm1419, %v1420, %v1418
        %v1422 = vclz %v1421
        %v1423 = vsub.s32 %v1422, 2
        %vm1424 = vcmp.gt.s32.totalorder 0, %v1423
        %v1425 = vsel %vm1424, 0, %v1423
        %v1426 = vsub.s32 32, %v1425
        %v1427 = vshll.u32 %v1418, %v1425
        %v1428 = vshrl.u32 %v1410, %v1426
        %v1429 = vor.u32 %v1427, %v1428
        %v1430 = vsub.s32 4294967266, %v1425
        %v1431 = vadd.s32 %v1430, 127
        %v1432 = vshll.u32 %v1431, 23
        %v1433 = vor.u32 4788187, %v1432
        %v1434 = vand.u32 2147483647, %v1433
        %v1436 = vcvt.s32.f32 %v1429
        %v1437 = vmul.f32 %v1436, %v1434
        %v1438 = vxor.u32 %v1437, 2147483648
        %v1439 = vsel %vm1356, %v1438, %v1437
        %v1440 = vsub.s32 4, %v1416
        %v1441 = vsel %vm1356, %v1440, %v1416
        %v1442 = vsel %vm1355, %v640, %v1439
        %v1443 = vsel %vm1355, 0, %v1441
        %v1444 = vcosq.f32.pop %v1442
        %v1445 = vsinq.f32.pop %v1442
        %vm1446 = vweird.f32 %v640
        %v1447 = vadd.s32 %v1443, 3
        %v1448 = vand.u32 %v1447, 3
        %vm1449 = vcmp.lt.s32.totalorder %v1448, 2
        %vm1450 = vcmp.eq.s32.totalorder %v1448, 0
        %v1451 = vxor.u32 %v1445, 2147483648
        %v1452 = vsel %vm1450, %v1444, %v1451
        %vm1453 = vcmp.eq.s32.totalorder %v1448, 2
        %v1454 = vxor.u32 %v1444, 2147483648
        %v1455 = vsel %vm1453, %v1454, %v1445
        %v1456 = vsel %vm1449, %v1452, %v1455
        %v1457 = vsel %vm1446, nan, %v1456
        %v1458 = vand.u32 2147483647, %v642
        %vm1459 = vcmp.le.f32.partialorder %v1458, 0.7853982
        %vm1460 = vcmp.lt.s32.totalorder %v642, 0
        %v1461 = vand.u32 %v642, 2139095040
        %v1462 = vshrl.u32 %v1461, 23
        %v1463 = vsub.s32 %v1462, 127
        %v1464 = vand.u32 2147483647, %v642
        %v1465 = vand.u32 %v1464, 8388607
        %v1466 = vor.u32 %v1465, 8388608
        %v1467 = vsub.s32 0, %v1466
        %v1468 = vadd.s32 %v1463, 1
        %vm1469 = vcmp.gt.s32.totalorder %v1468, 0
        %v1470 = vsel %vm1469, %v1468, 0
        %v1471 = vshrl.u32 %v1470, 5
        %v1472 = vand.u32 %v1470, 31
        %v1473 = vsub.s32 32, %v1472
        %v1474 = vshrl.u32 683565275, %v1473
        %v1475 = vshll.u32 683565275, %v1472
        %v1476 = vshrl.u32 2475754826, %v1473
        %v1477 = vor.u32 %v1475, %v1476
        %v1478 = vshll.u32 2475754826, %v1472
        %v1479 = vshrl.u32 2131351028, %v1473
        %v1480 = vor.u32 %v1478, %v1479
        %v1481 = vshll.u32 2131351028, %v1472
        %v1482 = vshrl.u32 2102212464, %v1473
        %v1483 = vor.u32 %v1481, %v1482
        %v1484 = vshll.u32 2102212464, %v1472
        %v1485 = vshrl.u32 920167782, %v1473
        %v1486 = vor.u32 %v1484, %v1485
        %v1487 = vshll.u32 920167782, %v1472
        %v1488 = vshrl.u32 1326507024, %v1473
        %v1489 = vor.u32 %v1487, %v1488
        %vm1490 = vcmp.lt.s32.totalorder %v1471, 1
        %vm1491 = vcmp.lt.s32.totalorder %v1471, 2
        %vm1492 = vcmp.lt.s32.totalorder %v1471, 3
        %vm1493 = vcmp.lt.s32.totalorder %v1471, 4
        %v1494 = vsel %vm1490, %v1474, %v1477
        %v1495 = vsel %vm1493, %v1483, 2102212464
        %v1496 = vsel %vm1492, %v1480, %v1495
        %v1497 = vsel %vm1491, %v1494, %v1496
        %v1498 = vsel %vm1490, %v1477, %v1480
        %v1499 = vsel %vm1493, %v1486, 920167782
        %v1500 = vsel %vm1492, %v1483, %v1499
        %v1501 = vsel %vm1491, %v1498, %v1500
        %v1502 = vsel %vm1490, %v1480, %v1483
        %v1503 = vsel %vm1493, %v1489, 1326507024
        %v1504 = vsel %vm1492, %v1486, %v1503
        %v1505 = vsel %vm1491, %v1502, %v1504
        %v1506 = vshll.u32 %v1466, 8
        %v1507 = vmul.u32.u64.compose %v1506, %v1505
        %v1508 = vextract.low.u32 %v1507
        %v1509 = vextract.high.u32 %v1507
        %v1510 = vmul.u32.u64.compose %v1506, %v1501
        %v1511 = vextract.low.u32 %v1510
        %v1512 = vextract.high.u32 %v1510
        %v1513 = vmul.u32 %v1506, %v1497
        %v1514 = vadd.s32 %v1509, %v1511
        %vm1515 = vc.u32 %v1509, %v1511
        %v1516 = vadd.s32 %v1512, 1
        %v1517 = vsel %vm1515, %v1516, %v1512
        %v1518 = vadd.s32 %v1513, %v1517
        %v1519 = vadd.s32 %v1518, 536870912
        %v1520 = vshrl.u32 %v1519, 30
        %v1521 = vshll.u32 %v1520, 30
        %v1522 = vsub.s32 %v1518, %v1521
        %vm1523 = vcmp.lt.s32.totalorder %v1522, 0
        %v1524 = vsub.s32 0, %v1522
        %v1525 = vsel %vm1523, %v1524, %v1522
        %v1526 = vclz %v1525
        %v1527 = vsub.s32 %v1526, 2
        %vm1528 = vcmp.gt.s32.totalorder 0, %v1527
        %v1529 = vsel %vm1528, 0, %v1527
        %v1530 = vsub.s32 32, %v1529
        %v1531 = vshll.u32 %v1522, %v1529
        %v1532 = vshrl.u32 %v1514, %v1530
        %v1533 = vor.u32 %v1531, %v1532
        %v1534 = vsub.s32 4294967266, %v1529
        %v1535 = vadd.s32 %v1534, 127
        %v1536 = vshll.u32 %v1535, 23
        %v1537 = vor.u32 4788187, %v1536
        %v1538 = vand.u32 2147483647, %v1537
        %v1540 = vcvt.s32.f32 %v1533
        %v1541 = vmul.f32 %v1540, %v1538
        %v1542 = vxor.u32 %v1541, 2147483648
        %v1543 = vsel %vm1460, %v1542, %v1541
        %v1544 = vsub.s32 4, %v1520
        %v1545 = vsel %vm1460, %v1544, %v1520
        %v1546 = vsel %vm1459, %v642, %v1543
        %v1547 = vsel %vm1459, 0, %v1545
        %v1548 = vcosq.f32.pop %v1546
        %v1549 = vsinq.f32.pop %v1546
        %vm1550 = vweird.f32 %v642
        %v1551 = vadd.s32 %v1547, 3
        %v1552 = vand.u32 %v1551, 3
        %vm1553 = vcmp.lt.s32.totalorder %v1552, 2
        %vm1554 = vcmp.eq.s32.totalorder %v1552, 0
        %v1555 = vxor.u32 %v1549, 2147483648
        %v1556 = vsel %vm1554, %v1548, %v1555
        %vm1557 = vcmp.eq.s32.totalorder %v1552, 2
        %v1558 = vxor.u32 %v1548, 2147483648
        %v1559 = vsel %vm1557, %v1558, %v1549
        %v1560 = vsel %vm1553, %v1556, %v1559
        %v1561 = vsel %vm1550, nan, %v1560
        %v1562 = vand.u32 2147483647, %v683
        %vm1563 = vcmp.le.f32.partialorder %v1562, 0.7853982
        %vm1564 = vcmp.lt.s32.totalorder %v683, 0
        %v1565 = vand.u32 %v683, 2139095040
        %v1566 = vshrl.u32 %v1565, 23
        %v1567 = vsub.s32 %v1566, 127
        %v1568 = vand.u32 2147483647, %v683
        %v1569 = vand.u32 %v1568, 8388607
        %v1570 = vor.u32 %v1569, 8388608
        %v1571 = vsub.s32 0, %v1570
        %v1572 = vadd.s32 %v1567, 1
        %vm1573 = vcmp.gt.s32.totalorder %v1572, 0
        %v1574 = vsel %vm1573, %v1572, 0
        %v1575 = vshrl.u32 %v1574, 5
        %v1576 = vand.u32 %v1574, 31
        %v1577 = vsub.s32 32, %v1576
        %v1578 = vshrl.u32 683565275, %v1577
        %v1579 = vshll.u32 683565275, %v1576
        %v1580 = vshrl.u32 2475754826, %v1577
        %v1581 = vor.u32 %v1579, %v1580
        %v1582 = vshll.u32 2475754826, %v1576
        %v1583 = vshrl.u32 2131351028, %v1577
        %v1584 = vor.u32 %v1582, %v1583
        %v1585 = vshll.u32 2131351028, %v1576
        %v1586 = vshrl.u32 2102212464, %v1577
        %v1587 = vor.u32 %v1585, %v1586
        %v1588 = vshll.u32 2102212464, %v1576
        %v1589 = vshrl.u32 920167782, %v1577
        %v1590 = vor.u32 %v1588, %v1589
        %v1591 = vshll.u32 920167782, %v1576
        %v1592 = vshrl.u32 1326507024, %v1577
        %v1593 = vor.u32 %v1591, %v1592
        %vm1594 = vcmp.lt.s32.totalorder %v1575, 1
        %vm1595 = vcmp.lt.s32.totalorder %v1575, 2
        %vm1596 = vcmp.lt.s32.totalorder %v1575, 3
        %vm1597 = vcmp.lt.s32.totalorder %v1575, 4
        %v1598 = vsel %vm1594, %v1578, %v1581
        %v1599 = vsel %vm1597, %v1587, 2102212464
        %v1600 = vsel %vm1596, %v1584, %v1599
        %v1601 = vsel %vm1595, %v1598, %v1600
        %v1602 = vsel %vm1594, %v1581, %v1584
        %v1603 = vsel %vm1597, %v1590, 920167782
        %v1604 = vsel %vm1596, %v1587, %v1603
        %v1605 = vsel %vm1595, %v1602, %v1604
        %v1606 = vsel %vm1594, %v1584, %v1587
        %v1607 = vsel %vm1597, %v1593, 1326507024
        %v1608 = vsel %vm1596, %v1590, %v1607
        %v1609 = vsel %vm1595, %v1606, %v1608
        %v1610 = vshll.u32 %v1570, 8
        %v1611 = vmul.u32.u64.compose %v1610, %v1609
        %v1612 = vextract.low.u32 %v1611
        %v1613 = vextract.high.u32 %v1611
        %v1614 = vmul.u32.u64.compose %v1610, %v1605
        %v1615 = vextract.low.u32 %v1614
        %v1616 = vextract.high.u32 %v1614
        %v1617 = vmul.u32 %v1610, %v1601
        %v1618 = vadd.s32 %v1613, %v1615
        %vm1619 = vc.u32 %v1613, %v1615
        %v1620 = vadd.s32 %v1616, 1
        %v1621 = vsel %vm1619, %v1620, %v1616
        %v1622 = vadd.s32 %v1617, %v1621
        %v1623 = vadd.s32 %v1622, 536870912
        %v1624 = vshrl.u32 %v1623, 30
        %v1625 = vshll.u32 %v1624, 30
        %v1626 = vsub.s32 %v1622, %v1625
        %vm1627 = vcmp.lt.s32.totalorder %v1626, 0
        %v1628 = vsub.s32 0, %v1626
        %v1629 = vsel %vm1627, %v1628, %v1626
        %v1630 = vclz %v1629
        %v1631 = vsub.s32 %v1630, 2
        %vm1632 = vcmp.gt.s32.totalorder 0, %v1631
        %v1633 = vsel %vm1632, 0, %v1631
        %v1634 = vsub.s32 32, %v1633
        %v1635 = vshll.u32 %v1626, %v1633
        %v1636 = vshrl.u32 %v1618, %v1634
        %v1637 = vor.u32 %v1635, %v1636
        %v1638 = vsub.s32 4294967266, %v1633
        %v1639 = vadd.s32 %v1638, 127
        %v1640 = vshll.u32 %v1639, 23
        %v1641 = vor.u32 4788187, %v1640
        %v1642 = vand.u32 2147483647, %v1641
        %v1644 = vcvt.s32.f32 %v1637
        %v1645 = vmul.f32 %v1644, %v1642
        %v1646 = vxor.u32 %v1645, 2147483648
        %v1647 = vsel %vm1564, %v1646, %v1645
        %v1648 = vsub.s32 4, %v1624
        %v1649 = vsel %vm1564, %v1648, %v1624
        %v1650 = vsel %vm1563, %v683, %v1647
        %v1651 = vsel %vm1563, 0, %v1649
        %v1652 = vcosq.f32.pop %v1650
        %v1653 = vsinq.f32.pop %v1650
        %vm1654 = vweird.f32 %v683
        %v1655 = vadd.s32 %v1651, 3
        %v1656 = vand.u32 %v1655, 3
        %vm1657 = vcmp.lt.s32.totalorder %v1656, 2
        %vm1658 = vcmp.eq.s32.totalorder %v1656, 0
        %v1659 = vxor.u32 %v1653, 2147483648
        %v1660 = vsel %vm1658, %v1652, %v1659
        %vm1661 = vcmp.eq.s32.totalorder %v1656, 2
        %v1662 = vxor.u32 %v1652, 2147483648
        %v1663 = vsel %vm1661, %v1662, %v1653
        %v1664 = vsel %vm1657, %v1660, %v1663
        %v1665 = vsel %vm1654, nan, %v1664
        %v1666 = vand.u32 2147483647, %v685
        %vm1667 = vcmp.le.f32.partialorder %v1666, 0.7853982
        %vm1668 = vcmp.lt.s32.totalorder %v685, 0
        %v1669 = vand.u32 %v685, 2139095040
        %v1670 = vshrl.u32 %v1669, 23
        %v1671 = vsub.s32 %v1670, 127
        %v1672 = vand.u32 2147483647, %v685
        %v1673 = vand.u32 %v1672, 8388607
        %v1674 = vor.u32 %v1673, 8388608
        %v1675 = vsub.s32 0, %v1674
        %v1676 = vadd.s32 %v1671, 1
        %vm1677 = vcmp.gt.s32.totalorder %v1676, 0
        %v1678 = vsel %vm1677, %v1676, 0
        %v1679 = vshrl.u32 %v1678, 5
        %v1680 = vand.u32 %v1678, 31
        %v1681 = vsub.s32 32, %v1680
        %v1682 = vshrl.u32 683565275, %v1681
        %v1683 = vshll.u32 683565275, %v1680
        %v1684 = vshrl.u32 2475754826, %v1681
        %v1685 = vor.u32 %v1683, %v1684
        %v1686 = vshll.u32 2475754826, %v1680
        %v1687 = vshrl.u32 2131351028, %v1681
        %v1688 = vor.u32 %v1686, %v1687
        %v1689 = vshll.u32 2131351028, %v1680
        %v1690 = vshrl.u32 2102212464, %v1681
        %v1691 = vor.u32 %v1689, %v1690
        %v1692 = vshll.u32 2102212464, %v1680
        %v1693 = vshrl.u32 920167782, %v1681
        %v1694 = vor.u32 %v1692, %v1693
        %v1695 = vshll.u32 920167782, %v1680
        %v1696 = vshrl.u32 1326507024, %v1681
        %v1697 = vor.u32 %v1695, %v1696
        %vm1698 = vcmp.lt.s32.totalorder %v1679, 1
        %vm1699 = vcmp.lt.s32.totalorder %v1679, 2
        %vm1700 = vcmp.lt.s32.totalorder %v1679, 3
        %vm1701 = vcmp.lt.s32.totalorder %v1679, 4
        %v1702 = vsel %vm1698, %v1682, %v1685
        %v1703 = vsel %vm1701, %v1691, 2102212464
        %v1704 = vsel %vm1700, %v1688, %v1703
        %v1705 = vsel %vm1699, %v1702, %v1704
        %v1706 = vsel %vm1698, %v1685, %v1688
        %v1707 = vsel %vm1701, %v1694, 920167782
        %v1708 = vsel %vm1700, %v1691, %v1707
        %v1709 = vsel %vm1699, %v1706, %v1708
        %v1710 = vsel %vm1698, %v1688, %v1691
        %v1711 = vsel %vm1701, %v1697, 1326507024
        %v1712 = vsel %vm1700, %v1694, %v1711
        %v1713 = vsel %vm1699, %v1710, %v1712
        %v1714 = vshll.u32 %v1674, 8
        %v1715 = vmul.u32.u64.compose %v1714, %v1713
        %v1716 = vextract.low.u32 %v1715
        %v1717 = vextract.high.u32 %v1715
        %v1718 = vmul.u32.u64.compose %v1714, %v1709
        %v1719 = vextract.low.u32 %v1718
        %v1720 = vextract.high.u32 %v1718
        %v1721 = vmul.u32 %v1714, %v1705
        %v1722 = vadd.s32 %v1717, %v1719
        %vm1723 = vc.u32 %v1717, %v1719
        %v1724 = vadd.s32 %v1720, 1
        %v1725 = vsel %vm1723, %v1724, %v1720
        %v1726 = vadd.s32 %v1721, %v1725
        %v1727 = vadd.s32 %v1726, 536870912
        %v1728 = vshrl.u32 %v1727, 30
        %v1729 = vshll.u32 %v1728, 30
        %v1730 = vsub.s32 %v1726, %v1729
        %vm1731 = vcmp.lt.s32.totalorder %v1730, 0
        %v1732 = vsub.s32 0, %v1730
        %v1733 = vsel %vm1731, %v1732, %v1730
        %v1734 = vclz %v1733
        %v1735 = vsub.s32 %v1734, 2
        %vm1736 = vcmp.gt.s32.totalorder 0, %v1735
        %v1737 = vsel %vm1736, 0, %v1735
        %v1738 = vsub.s32 32, %v1737
        %v1739 = vshll.u32 %v1730, %v1737
        %v1740 = vshrl.u32 %v1722, %v1738
        %v1741 = vor.u32 %v1739, %v1740
        %v1742 = vsub.s32 4294967266, %v1737
        %v1743 = vadd.s32 %v1742, 127
        %v1744 = vshll.u32 %v1743, 23
        %v1745 = vor.u32 4788187, %v1744
        %v1746 = vand.u32 2147483647, %v1745
        %v1748 = vcvt.s32.f32 %v1741
        %v1749 = vmul.f32 %v1748, %v1746
        %v1750 = vxor.u32 %v1749, 2147483648
        %v1751 = vsel %vm1668, %v1750, %v1749
        %v1752 = vsub.s32 4, %v1728
        %v1753 = vsel %vm1668, %v1752, %v1728
        %v1754 = vsel %vm1667, %v685, %v1751
        %v1755 = vsel %vm1667, 0, %v1753
        %v1756 = vcosq.f32.pop %v1754
        %v1757 = vsinq.f32.pop %v1754
        %vm1758 = vweird.f32 %v685
        %v1759 = vadd.s32 %v1755, 3
        %v1760 = vand.u32 %v1759, 3
        %vm1761 = vcmp.lt.s32.totalorder %v1760, 2
        %vm1762 = vcmp.eq.s32.totalorder %v1760, 0
        %v1763 = vxor.u32 %v1757, 2147483648
        %v1764 = vsel %vm1762, %v1756, %v1763
        %vm1765 = vcmp.eq.s32.totalorder %v1760, 2
        %v1766 = vxor.u32 %v1756, 2147483648
        %v1767 = vsel %vm1765, %v1766, %v1757
        %v1768 = vsel %vm1761, %v1764, %v1767
        %v1769 = vsel %vm1758, nan, %v1768
        %v1770 = vand.u32 2147483647, %v726
        %vm1771 = vcmp.le.f32.partialorder %v1770, 0.7853982
        %vm1772 = vcmp.lt.s32.totalorder %v726, 0
        %v1773 = vand.u32 %v726, 2139095040
        %v1774 = vshrl.u32 %v1773, 23
        %v1775 = vsub.s32 %v1774, 127
        %v1776 = vand.u32 2147483647, %v726
        %v1777 = vand.u32 %v1776, 8388607
        %v1778 = vor.u32 %v1777, 8388608
        %v1779 = vsub.s32 0, %v1778
        %v1780 = vadd.s32 %v1775, 1
        %vm1781 = vcmp.gt.s32.totalorder %v1780, 0
        %v1782 = vsel %vm1781, %v1780, 0
        %v1783 = vshrl.u32 %v1782, 5
        %v1784 = vand.u32 %v1782, 31
        %v1785 = vsub.s32 32, %v1784
        %v1786 = vshrl.u32 683565275, %v1785
        %v1787 = vshll.u32 683565275, %v1784
        %v1788 = vshrl.u32 2475754826, %v1785
        %v1789 = vor.u32 %v1787, %v1788
        %v1790 = vshll.u32 2475754826, %v1784
        %v1791 = vshrl.u32 2131351028, %v1785
        %v1792 = vor.u32 %v1790, %v1791
        %v1793 = vshll.u32 2131351028, %v1784
        %v1794 = vshrl.u32 2102212464, %v1785
        %v1795 = vor.u32 %v1793, %v1794
        %v1796 = vshll.u32 2102212464, %v1784
        %v1797 = vshrl.u32 920167782, %v1785
        %v1798 = vor.u32 %v1796, %v1797
        %v1799 = vshll.u32 920167782, %v1784
        %v1800 = vshrl.u32 1326507024, %v1785
        %v1801 = vor.u32 %v1799, %v1800
        %vm1802 = vcmp.lt.s32.totalorder %v1783, 1
        %vm1803 = vcmp.lt.s32.totalorder %v1783, 2
        %vm1804 = vcmp.lt.s32.totalorder %v1783, 3
        %vm1805 = vcmp.lt.s32.totalorder %v1783, 4
        %v1806 = vsel %vm1802, %v1786, %v1789
        %v1807 = vsel %vm1805, %v1795, 2102212464
        %v1808 = vsel %vm1804, %v1792, %v1807
        %v1809 = vsel %vm1803, %v1806, %v1808
        %v1810 = vsel %vm1802, %v1789, %v1792
        %v1811 = vsel %vm1805, %v1798, 920167782
        %v1812 = vsel %vm1804, %v1795, %v1811
        %v1813 = vsel %vm1803, %v1810, %v1812
        %v1814 = vsel %vm1802, %v1792, %v1795
        %v1815 = vsel %vm1805, %v1801, 1326507024
        %v1816 = vsel %vm1804, %v1798, %v1815
        %v1817 = vsel %vm1803, %v1814, %v1816
        %v1818 = vshll.u32 %v1778, 8
        %v1819 = vmul.u32.u64.compose %v1818, %v1817
        %v1820 = vextract.low.u32 %v1819
        %v1821 = vextract.high.u32 %v1819
        %v1822 = vmul.u32.u64.compose %v1818, %v1813
        %v1823 = vextract.low.u32 %v1822
        %v1824 = vextract.high.u32 %v1822
        %v1825 = vmul.u32 %v1818, %v1809
        %v1826 = vadd.s32 %v1821, %v1823
        %vm1827 = vc.u32 %v1821, %v1823
        %v1828 = vadd.s32 %v1824, 1
        %v1829 = vsel %vm1827, %v1828, %v1824
        %v1830 = vadd.s32 %v1825, %v1829
        %v1831 = vadd.s32 %v1830, 536870912
        %v1832 = vshrl.u32 %v1831, 30
        %v1833 = vshll.u32 %v1832, 30
        %v1834 = vsub.s32 %v1830, %v1833
        %vm1835 = vcmp.lt.s32.totalorder %v1834, 0
        %v1836 = vsub.s32 0, %v1834
        %v1837 = vsel %vm1835, %v1836, %v1834
        %v1838 = vclz %v1837
        %v1839 = vsub.s32 %v1838, 2
        %vm1840 = vcmp.gt.s32.totalorder 0, %v1839
        %v1841 = vsel %vm1840, 0, %v1839
        %v1842 = vsub.s32 32, %v1841
        %v1843 = vshll.u32 %v1834, %v1841
        %v1844 = vshrl.u32 %v1826, %v1842
        %v1845 = vor.u32 %v1843, %v1844
        %v1846 = vsub.s32 4294967266, %v1841
        %v1847 = vadd.s32 %v1846, 127
        %v1848 = vshll.u32 %v1847, 23
        %v1849 = vor.u32 4788187, %v1848
        %v1850 = vand.u32 2147483647, %v1849
        %v1852 = vcvt.s32.f32 %v1845
        %v1853 = vmul.f32 %v1852, %v1850
        %v1854 = vxor.u32 %v1853, 2147483648
        %v1855 = vsel %vm1772, %v1854, %v1853
        %v1856 = vsub.s32 4, %v1832
        %v1857 = vsel %vm1772, %v1856, %v1832
        %v1858 = vsel %vm1771, %v726, %v1855
        %v1859 = vsel %vm1771, 0, %v1857
        %v1860 = vcosq.f32.pop %v1858
        %v1861 = vsinq.f32.pop %v1858
        %vm1862 = vweird.f32 %v726
        %v1863 = vadd.s32 %v1859, 3
        %v1864 = vand.u32 %v1863, 3
        %vm1865 = vcmp.lt.s32.totalorder %v1864, 2
        %vm1866 = vcmp.eq.s32.totalorder %v1864, 0
        %v1867 = vxor.u32 %v1861, 2147483648
        %v1868 = vsel %vm1866, %v1860, %v1867
        %vm1869 = vcmp.eq.s32.totalorder %v1864, 2
        %v1870 = vxor.u32 %v1860, 2147483648
        %v1871 = vsel %vm1869, %v1870, %v1861
        %v1872 = vsel %vm1865, %v1868, %v1871
        %v1873 = vsel %vm1862, nan, %v1872
        %v1874 = vand.u32 2147483647, %v728
        %vm1875 = vcmp.le.f32.partialorder %v1874, 0.7853982
        %vm1876 = vcmp.lt.s32.totalorder %v728, 0
        %v1877 = vand.u32 %v728, 2139095040
        %v1878 = vshrl.u32 %v1877, 23
        %v1879 = vsub.s32 %v1878, 127
        %v1880 = vand.u32 2147483647, %v728
        %v1881 = vand.u32 %v1880, 8388607
        %v1882 = vor.u32 %v1881, 8388608
        %v1883 = vsub.s32 0, %v1882
        %v1884 = vadd.s32 %v1879, 1
        %vm1885 = vcmp.gt.s32.totalorder %v1884, 0
        %v1886 = vsel %vm1885, %v1884, 0
        %v1887 = vshrl.u32 %v1886, 5
        %v1888 = vand.u32 %v1886, 31
        %v1889 = vsub.s32 32, %v1888
        %v1890 = vshrl.u32 683565275, %v1889
        %v1891 = vshll.u32 683565275, %v1888
        %v1892 = vshrl.u32 2475754826, %v1889
        %v1893 = vor.u32 %v1891, %v1892
        %v1894 = vshll.u32 2475754826, %v1888
        %v1895 = vshrl.u32 2131351028, %v1889
        %v1896 = vor.u32 %v1894, %v1895
        %v1897 = vshll.u32 2131351028, %v1888
        %v1898 = vshrl.u32 2102212464, %v1889
        %v1899 = vor.u32 %v1897, %v1898
        %v1900 = vshll.u32 2102212464, %v1888
        %v1901 = vshrl.u32 920167782, %v1889
        %v1902 = vor.u32 %v1900, %v1901
        %v1903 = vshll.u32 920167782, %v1888
        %v1904 = vshrl.u32 1326507024, %v1889
        %v1905 = vor.u32 %v1903, %v1904
        %vm1906 = vcmp.lt.s32.totalorder %v1887, 1
        %vm1907 = vcmp.lt.s32.totalorder %v1887, 2
        %vm1908 = vcmp.lt.s32.totalorder %v1887, 3
        %vm1909 = vcmp.lt.s32.totalorder %v1887, 4
        %v1910 = vsel %vm1906, %v1890, %v1893
        %v1911 = vsel %vm1909, %v1899, 2102212464
        %v1912 = vsel %vm1908, %v1896, %v1911
        %v1913 = vsel %vm1907, %v1910, %v1912
        %v1914 = vsel %vm1906, %v1893, %v1896
        %v1915 = vsel %vm1909, %v1902, 920167782
        %v1916 = vsel %vm1908, %v1899, %v1915
        %v1917 = vsel %vm1907, %v1914, %v1916
        %v1918 = vsel %vm1906, %v1896, %v1899
        %v1919 = vsel %vm1909, %v1905, 1326507024
        %v1920 = vsel %vm1908, %v1902, %v1919
        %v1921 = vsel %vm1907, %v1918, %v1920
        %v1922 = vshll.u32 %v1882, 8
        %v1923 = vmul.u32.u64.compose %v1922, %v1921
        %v1924 = vextract.low.u32 %v1923
        %v1925 = vextract.high.u32 %v1923
        %v1926 = vmul.u32.u64.compose %v1922, %v1917
        %v1927 = vextract.low.u32 %v1926
        %v1928 = vextract.high.u32 %v1926
        %v1929 = vmul.u32 %v1922, %v1913
        %v1930 = vadd.s32 %v1925, %v1927
        %vm1931 = vc.u32 %v1925, %v1927
        %v1932 = vadd.s32 %v1928, 1
        %v1933 = vsel %vm1931, %v1932, %v1928
        %v1934 = vadd.s32 %v1929, %v1933
        %v1935 = vadd.s32 %v1934, 536870912
        %v1936 = vshrl.u32 %v1935, 30
        %v1937 = vshll.u32 %v1936, 30
        %v1938 = vsub.s32 %v1934, %v1937
        %vm1939 = vcmp.lt.s32.totalorder %v1938, 0
        %v1940 = vsub.s32 0, %v1938
        %v1941 = vsel %vm1939, %v1940, %v1938
        %v1942 = vclz %v1941
        %v1943 = vsub.s32 %v1942, 2
        %vm1944 = vcmp.gt.s32.totalorder 0, %v1943
        %v1945 = vsel %vm1944, 0, %v1943
        %v1946 = vsub.s32 32, %v1945
        %v1947 = vshll.u32 %v1938, %v1945
        %v1948 = vshrl.u32 %v1930, %v1946
        %v1949 = vor.u32 %v1947, %v1948
        %v1950 = vsub.s32 4294967266, %v1945
        %v1951 = vadd.s32 %v1950, 127
        %v1952 = vshll.u32 %v1951, 23
        %v1953 = vor.u32 4788187, %v1952
        %v1954 = vand.u32 2147483647, %v1953
        %v1956 = vcvt.s32.f32 %v1949
        %v1957 = vmul.f32 %v1956, %v1954
        %v1958 = vxor.u32 %v1957, 2147483648
        %v1959 = vsel %vm1876, %v1958, %v1957
        %v1960 = vsub.s32 4, %v1936
        %v1961 = vsel %vm1876, %v1960, %v1936
        %v1962 = vsel %vm1875, %v728, %v1959
        %v1963 = vsel %vm1875, 0, %v1961
        %v1964 = vcosq.f32.pop %v1962
        %v1965 = vsinq.f32.pop %v1962
        %vm1966 = vweird.f32 %v728
        %v1967 = vadd.s32 %v1963, 3
        %v1968 = vand.u32 %v1967, 3
        %vm1969 = vcmp.lt.s32.totalorder %v1968, 2
        %vm1970 = vcmp.eq.s32.totalorder %v1968, 0
        %v1971 = vxor.u32 %v1965, 2147483648
        %v1972 = vsel %vm1970, %v1964, %v1971
        %vm1973 = vcmp.eq.s32.totalorder %v1968, 2
        %v1974 = vxor.u32 %v1964, 2147483648
        %v1975 = vsel %vm1973, %v1974, %v1965
        %v1976 = vsel %vm1969, %v1972, %v1975
        %v1977 = vsel %vm1966, nan, %v1976
        %1978 = vst [vmem:[%s203] sm:$0xff] %v833
        %1979 = vst [vmem:[%s203 + $0x8] sm:$0xff] %v937
        %1980 = vst [vmem:[%s203 + $0x10] sm:$0xff] %v1041
        %1981 = vst [vmem:[%s203 + $0x18] sm:$0xff] %v1145
        %1982 = vst [vmem:[%s203 + $0x20] sm:$0xff] %v1249
        %1983 = vst [vmem:[%s203 + $0x28] sm:$0xff] %v1353
        %1984 = vst [vmem:[%s203 + $0x30] sm:$0xff] %v1457
        %1985 = vst [vmem:[%s203 + $0x38] sm:$0xff] %v1561
        %1986 = vst [vmem:[%s203 + $0x40] sm:$0xff] %v1665
        %1987 = vst [vmem:[%s203 + $0x48] sm:$0xff] %v1769
        %1988 = vst [vmem:[%s203 + $0x50] sm:$0xff] %v1873
        %1989 = vst [vmem:[%s203 + $0x58] sm:$0xff] %v1977
        %s1990 = sand.u32 %s97, 1
        %s1991 = scalar_lea.sflag [#allocation4], %s1990
        %s1992 = sand.u32 %s97, 1
        %s1993 = smul.addr %s1992, 96
        %s1994 = scalar_lea.vmem [#allocation7], %s1993
        // Predicated region
        $region41: #{tpu_custom_call.1} parent=31 // pred_check
          %p1995 = pneg %p107
        $region42: #{tpu_custom_call.1} parent=31 // pred_check_branch
          %1997 = sbr.rel (%p1995) target = $region44
        $region43: #{tpu_custom_call.1} parent=31 // pred_region
          %s1998 = smul.u32 2, %s21
          %s2000 = ssub.s32 1536, 1536
          %2001 = vsyncadd %s1991, %s2000
          %s2002 = smul.addr %s1998, 6
          %s2003 = smul.addr %s2002, 128
          %s2004 = scalar_lea.hbm %s3, %s2003
          %s2005 = sshll.u32 %s1994, 4
          %s2006 = int_to_ptr.vmem [resolvable:$true] %s2005
          %2011 = dma.vmem_to_hbm [thread:$0]  %s2006, 1536, %s2004, %s1991, 768, 768, 48
        $region44: #{tpu_custom_call.1} parent=31 // pred_fallthru
          _
      $region32: #{tpu_custom_call.1} parent=5 // pred_fallthru
        _
      %p2012 = scmp.le.s32.totalorder 2, %s16
      // Predicated region
      $region45: #{tpu_custom_call.1} parent=5 // pred_check
        %p2013 = pneg %p2012
      $region46: #{tpu_custom_call.1} parent=5 // pred_check_branch
        %2015 = sbr.rel (%p2013) target = $region48
      $region47: #{tpu_custom_call.1} parent=5 // pred_region
        %s2016 = ssub.s32 %s16, 2
        // Predicated region
        $region49: #{tpu_custom_call.1} parent=47 // pred_check
          %p2017 = pneg %p113
        $region50: #{tpu_custom_call.1} parent=47 // pred_check_branch
          %2019 = sbr.rel (%p2017) target = $region52
        $region51: #{tpu_custom_call.1} parent=47 // pred_region
          %s2020 = sand.u32 %s98, 1
          %s2021 = scalar_lea.sflag [#allocation4], %s2020
          %s2022 = sand.u32 %s98, 1
          %s2023 = smul.addr %s2022, 96
          %s2024 = scalar_lea.vmem [#allocation7], %s2023
          %2025 = dma.done %s2021, 1536
        $region52: #{tpu_custom_call.1} parent=47 // pred_fallthru
          _
      $region48: #{tpu_custom_call.1} parent=5 // pred_fallthru
        _
    $region6: #{tpu_custom_call.1} parent=1 // loop_footer
      %s20 = sadd.s32 1, %s16
    $region7: #{tpu_custom_call.1} parent=1 // loop_footer_branch
      %15 = sbr.rel target = $region3
    $region8: #{tpu_custom_call.1} parent=1 // loop_exit
      _
    %2026 = vsyncpa [#allocation3], 1
    %s2027 = scalar_lea.sflag [#allocation3], 1
    %2028 = vsyncpa %s2027, 1
    %2029 = vsyncpa [#allocation6], 1
    %2030 = vsyncpa [#allocation4], 1
    %s2031 = scalar_lea.sflag [#allocation4], 1
    %2032 = vsyncpa %s2031, 1

</llo_original>
